<compile_context>
chip_gen: v7x
topology: tpu7x:2x2x1
jax: 0.10.0
libtpu: 0.0.40
codegen_flags: <defaults>
</compile_context>

<pallas_src>
import jax
import jax.numpy as jnp
from jax.experimental import pallas as pl

# ---- small synthetic RoBERTa config (consistent with the module's forward) ----
VOCAB = 100
SEQ = 8
HIDDEN = 32          # roberta hidden size
N_HEADS = 2
HEAD_DIM = HIDDEN // N_HEADS
FFN = 64
N_LAYERS = 2
EMB_DIMS = 8         # asp_cat_emb dim; HIDDEN must be divisible by EMB_DIMS
N_LABELS = 28
LN_EPS = 1e-5
N_CLS_BLOCKS = HIDDEN // EMB_DIMS          # cls_embed.view(1, -1, emb_dims) rows
CAT_ROWS = N_LABELS + N_CLS_BLOCKS         # linear2 input size (28 + 4 = 32)

assert HIDDEN % EMB_DIMS == 0
assert HIDDEN % N_HEADS == 0

# ---- packed-slab row layout -------------------------------------------------
PW = 3 * HIDDEN                            # param-slab width (96 >= 3H, FFN, H)

# dynamic (per-call) slab rows, width = HIDDEN
DYN_X = 0                                  # SEQ rows: gathered word embeddings
DYN_BIAS = SEQ                             # 1 row:   additive key-mask bias
DYN_ASP = SEQ + 1                          # N_LABELS rows: gathered label embeddings
DYN_ROWS = SEQ + 1 + N_LABELS

# static param slab rows, width = PW
ROW_POS = 0                                # SEQ rows: position embeddings
ROW_EMB_LN = SEQ                           # 2 rows:   embedding LayerNorm g/b
ROW_LAYER0 = SEQ + 2
ROWS_PER_LAYER = 8                         # bqkv, bo, ln1g, ln1b, b1, b2, ln2g, ln2b
ROW_HEAD_CLS = ROW_LAYER0 + ROWS_PER_LAYER * N_LAYERS
ROW_HEAD_BIAS = ROW_HEAD_CLS + 1
ROW_ASP_W = ROW_HEAD_BIAS + 1
P_ROWS = ROW_ASP_W + N_LABELS


# --------------------------- fused Pallas kernel -----------------------------
def _layernorm(x, g, b):
    """LayerNorm over the last axis, one-pass variance (E[x^2] - mean^2)."""
    mu = jnp.mean(x, axis=-1, keepdims=True)
    var = jnp.mean(x * x, axis=-1, keepdims=True) - mu * mu
    return (x - mu) * jax.lax.rsqrt(var + LN_EPS) * g + b


def _fused_forward_kernel(dyn_ref, wA_ref, w2_ref, par_ref, out_ref):
    f32 = jnp.float32
    bf16 = jnp.bfloat16

    # ---- dynamic inputs (already gathered in the wrapper) ----
    x0 = dyn_ref[DYN_X:DYN_X + SEQ, :]                              # (S, H) f32
    bias = dyn_ref[DYN_BIAS:DYN_BIAS + 1, 0:SEQ]                    # (1, S) key bias
    asp = dyn_ref[DYN_ASP:DYN_ASP + N_LABELS, :]                    # (NL, H); cols>=E are 0

    def prow(r, w=HIDDEN):
        return par_ref[r:r + 1, 0:w]

    # roberta embeddings: word + position, then LayerNorm (token_type all-zero folded)
    pos = par_ref[ROW_POS:ROW_POS + SEQ, 0:HIDDEN]
    x = _layernorm(x0 + pos, prow(ROW_EMB_LN), prow(ROW_EMB_LN + 1))

    for l in range(N_LAYERS):
        wA = wA_ref[l]                                              # (H, 3H+H+FFN) bf16
        wqkv = wA[:, 0:3 * HIDDEN]                                  # Q cols pre-scaled
        wo = wA[:, 3 * HIDDEN:4 * HIDDEN]
        w1 = wA[:, 4 * HIDDEN:4 * HIDDEN + FFN]
        w2 = w2_ref[l]                                              # (FFN, H) bf16

        base = ROW_LAYER0 + ROWS_PER_LAYER * l
        bqkv = prow(base, 3 * HIDDEN)
        bo = prow(base + 1)
        ln1g, ln1b = prow(base + 2), prow(base + 3)
        b1 = prow(base + 4, FFN)
        b2 = prow(base + 5)
        ln2g, ln2b = prow(base + 6), prow(base + 7)

        # --- attention: fused QKV projection (bf16 operands, f32 accumulate) ---
        qkv = jnp.dot(x.astype(bf16), wqkv,
                      preferred_element_type=f32) + bqkv            # (S, 3H)
        o_heads = []
        for h in range(N_HEADS):
            q = qkv[:, h * HEAD_DIM:(h + 1) * HEAD_DIM]
            k = qkv[:, HIDDEN + h * HEAD_DIM:HIDDEN + (h + 1) * HEAD_DIM]
            v = qkv[:, 2 * HIDDEN + h * HEAD_DIM:2 * HIDDEN + (h + 1) * HEAD_DIM]
            s = jax.lax.dot_general(q, k, (((1,), (1,)), ((), ())),
                                    preferred_element_type=f32) + bias
            s = s - jnp.max(s, axis=-1, keepdims=True)              # f32 softmax
            p = jnp.exp(s)
            p = p * pl.reciprocal(jnp.sum(p, axis=-1, keepdims=True), approx=True)
            o_heads.append(jnp.dot(p, v, preferred_element_type=f32))  # (S, Dh)
        # single output projection for all heads (one MXU dot per layer)
        attn = jnp.dot(jnp.concatenate(o_heads, axis=-1).astype(bf16), wo,
                       preferred_element_type=f32) + bo
        x = _layernorm(attn + x, ln1g, ln1b)

        # --- FFN ---
        # TODO(synk): exact-erf GELU (PyTorch nn.GELU default); tanh approx used here.
        hdn = jax.nn.gelu(jnp.dot(x.astype(bf16), w1,
                                  preferred_element_type=f32) + b1)
        y = jnp.dot(hdn.astype(bf16), w2, preferred_element_type=f32) + b2
        x = _layernorm(y + x, ln2g, ln2b)

    # --- collapsed head: linear(cat([cls.view(-1,E), asp], 1)) -> linear2 -> sigmoid
    #     logit = cls . kron(w2_cls, w1) + sum(asp * outer(w2_asp, w1)) + fused_bias
    cls = x[0:1, :]                                                 # (1, H)
    head_cls = prow(ROW_HEAD_CLS)                                   # (1, H)
    fused_b = par_ref[ROW_HEAD_BIAS:ROW_HEAD_BIAS + 1, 0:1]         # (1, 1)
    asp_w = par_ref[ROW_ASP_W:ROW_ASP_W + N_LABELS, 0:HIDDEN]       # (NL, H); cols>=E are 0
    acc = cls * head_cls + jnp.sum(asp * asp_w, axis=0, keepdims=True)   # (1, H)
    logit = jnp.sum(acc, axis=-1, keepdims=True) + fused_b          # (1, 1)
    out_ref[...] = jax.nn.sigmoid(logit)


# --------------------------- parameters --------------------------------------
def init_params(key):
    def nrm(k, shape, scale=0.02):
        return scale * jax.random.normal(k, shape, dtype=jnp.float32)

    keys = iter(jax.random.split(key, 64))
    p = {
        "word_emb": nrm(next(keys), (VOCAB, HIDDEN)),
        "pos_emb": nrm(next(keys), (SEQ, HIDDEN)),
        "emb_ln_g": jnp.ones((HIDDEN,), jnp.float32),
        "emb_ln_b": jnp.zeros((HIDDEN,), jnp.float32),
        "layers": [],
    }
    for _ in range(N_LAYERS):
        p["layers"].append({
            "wq": nrm(next(keys), (HIDDEN, HIDDEN)), "bq": jnp.zeros((HIDDEN,), jnp.float32),
            "wk": nrm(next(keys), (HIDDEN, HIDDEN)), "bk": jnp.zeros((HIDDEN,), jnp.float32),
            "wv": nrm(next(keys), (HIDDEN, HIDDEN)), "bv": jnp.zeros((HIDDEN,), jnp.float32),
            "wo": nrm(next(keys), (HIDDEN, HIDDEN)), "bo": jnp.zeros((HIDDEN,), jnp.float32),
            "ln1_g": jnp.ones((HIDDEN,), jnp.float32), "ln1_b": jnp.zeros((HIDDEN,), jnp.float32),
            "w1": nrm(next(keys), (HIDDEN, FFN)), "b1": jnp.zeros((FFN,), jnp.float32),
            "w2": nrm(next(keys), (FFN, HIDDEN)), "b2": jnp.zeros((HIDDEN,), jnp.float32),
            "ln2_g": jnp.ones((HIDDEN,), jnp.float32), "ln2_b": jnp.zeros((HIDDEN,), jnp.float32),
        })
    p["asp_cat_emb"] = nrm(next(keys), (N_LABELS, EMB_DIMS))
    p["lin1_w"] = nrm(next(keys), (EMB_DIMS, 1))   # self.linear
    p["lin1_b"] = jnp.zeros((1,), jnp.float32)
    p["lin2_w"] = nrm(next(keys), (CAT_ROWS, 1))   # self.linear2
    p["lin2_b"] = jnp.zeros((1,), jnp.float32)
    return p


def pack_params(p):
    """One-time host-side packing into 3 static slabs:
       wA  (N_LAYERS, H, 3H+H+FFN) bf16  = [wqkv(Q pre-scaled) | wo | w1]
       w2  (N_LAYERS, FFN, H)      bf16
       par (P_ROWS, PW)            f32   = pos_emb, LN/bias rows, collapsed head."""
    scale = jnp.float32(1.0 / (HEAD_DIM ** 0.5))

    def layer_wA(l):
        wqkv = jnp.concatenate([l["wq"] * scale, l["wk"], l["wv"]], axis=1)  # (H, 3H)
        return jnp.concatenate([wqkv, l["wo"], l["w1"]], axis=1)            # (H, 3H+H+FFN)

    wA = jnp.stack([layer_wA(l) for l in p["layers"]]).astype(jnp.bfloat16)
    w2 = jnp.stack([l["w2"] for l in p["layers"]]).astype(jnp.bfloat16)

    def padrow(v):
        v = jnp.asarray(v, jnp.float32).reshape(1, -1)
        return jnp.pad(v, ((0, 0), (0, PW - v.shape[1])))

    rows = [jnp.pad(p["pos_emb"], ((0, 0), (0, PW - HIDDEN))),
            padrow(p["emb_ln_g"]), padrow(p["emb_ln_b"])]
    for l in p["layers"]:
        rows += [
            padrow(jnp.concatenate([l["bq"] * scale, l["bk"], l["bv"]])),
            padrow(l["bo"]),
            padrow(l["ln1_g"]), padrow(l["ln1_b"]),
            padrow(l["b1"]),
            padrow(l["b2"]),
            padrow(l["ln2_g"]), padrow(l["ln2_b"]),
        ]
    # collapsed linear -> linear2 head (no nonlinearity between them):
    #   logit = cls . kron(w2_cls, w1) + sum(asp * outer(w2_asp, w1))
    #           + (lin1_b * sum(lin2_w) + lin2_b)
    w1v = p["lin1_w"].reshape(EMB_DIMS)
    w2v = p["lin2_w"].reshape(CAT_ROWS)
    w2_cls, w2_asp = w2v[:N_CLS_BLOCKS], w2v[N_CLS_BLOCKS:]
    rows.append(padrow(jnp.kron(w2_cls, w1v)))                               # (1, H)
    fused_bias = p["lin1_b"][0] * jnp.sum(w2v) + p["lin2_b"][0]
    rows.append(padrow(jnp.array([fused_bias], jnp.float32)))
    rows.append(jnp.pad(jnp.outer(w2_asp, w1v), ((0, 0), (0, PW - EMB_DIMS))))  # (NL, PW)
    par = jnp.concatenate(rows, axis=0)
    assert par.shape == (P_ROWS, PW)

    return {"wA": wA, "w2": w2, "par": par,
            "word_emb": p["word_emb"], "asp_emb": p["asp_cat_emb"]}


# --------------------------- forward ------------------------------------------
def roberta_hiagm_forward(packed, tokens, attention_mask, labels):
    """tokens:[1,SEQ] int32, attention_mask:[1,SEQ] int32, labels:[1,N_LABELS] int32 -> [1] f32."""
    # wrapper-side gathers (one jnp.take each) + per-call dynamic slab
    x0 = jnp.take(packed["word_emb"], tokens[0], axis=0)                      # (S, H)
    bias = (1.0 - attention_mask.astype(jnp.float32)) * jnp.float32(-1e9)     # (1, S)
    bias = jnp.pad(bias, ((0, 0), (0, HIDDEN - SEQ)))
    asp = jnp.take(packed["asp_emb"], labels[0], axis=0)                      # (NL, E)
    asp = jnp.pad(asp, ((0, 0), (0, HIDDEN - EMB_DIMS)))
    dyn = jnp.concatenate([x0, bias, asp], axis=0).astype(jnp.float32)        # (DYN_ROWS, H)

    def full(shape):
        return pl.BlockSpec(shape, lambda i: (0,) * len(shape))

    out = pl.pallas_call(
        _fused_forward_kernel,
        out_shape=jax.ShapeDtypeStruct((1, 1), jnp.float32),
        grid=(1,),
        in_specs=[full(dyn.shape), full(packed["wA"].shape),
                  full(packed["w2"].shape), full(packed["par"].shape)],
        out_specs=full((1, 1)),
    )(dyn, packed["wA"], packed["w2"], packed["par"])
    return out.reshape(1)


# TODO(synk): pretrained-checkpoint load, LoRA adapter injection, fp16 (.half()) cast and
# stochastic dropout are not reproduced; forward uses bf16 matmul operands / f32 math and
# inference (no-dropout) semantics. BATCH_SIZE=1 as in the module; batching extra sequences
# through a parallel grid axis is the next step if throughput over many sequences matters.

if __name__ == "__main__":
    key = jax.random.PRNGKey(0)
    pkey, tkey, lkey = jax.random.split(key, 3)
    params = init_params(pkey)
    packed = pack_params(params)

    tokens = jax.random.randint(tkey, (1, SEQ), 0, VOCAB, dtype=jnp.int32)
    attention_mask = jnp.ones((1, SEQ), dtype=jnp.int32)
    labels = jax.random.permutation(
        lkey, jnp.arange(N_LABELS, dtype=jnp.int32)).reshape(1, N_LABELS)

    fwd = jax.jit(roberta_hiagm_forward)
    out = jax.block_until_ready(fwd(packed, tokens, attention_mask, labels))
    assert out.shape == (1,) and bool(jnp.all((out > 0.0) & (out < 1.0)))
    print("KERNEL_OK")
</pallas_src>

<mosaic_0001>
module attributes {stable_mosaic.version = 11 : i64} {
  func.func @_fused_forward_kernel(%arg0: i32, %arg1: memref<37x32xf32, #tpu.memory_space<vmem>>, %arg2: memref<2x32x192xbf16, #tpu.memory_space<vmem>>, %arg3: memref<2x64x32xbf16, #tpu.memory_space<vmem>>, %arg4: memref<56x96xf32, #tpu.memory_space<vmem>>, %arg5: memref<1x1xf32, #tpu.memory_space<vmem>>) attributes {dimension_semantics = [#tpu.dimension_semantics<arbitrary>], iteration_bounds = array<i64: 1>, scalar_prefetch = 0 : i64, scratch_operands = 0 : i64, tpu.core_type = #tpu.core_type<tc>, window_params = [{pipeline_mode = #tpu.pipeline_mode<synchronous>, transform_indices = @transform_0, window_bounds = array<i64: 37, 32>}, {pipeline_mode = #tpu.pipeline_mode<synchronous>, transform_indices = @transform_1, window_bounds = array<i64: 2, 32, 192>}, {pipeline_mode = #tpu.pipeline_mode<synchronous>, transform_indices = @transform_2, window_bounds = array<i64: 2, 64, 32>}, {pipeline_mode = #tpu.pipeline_mode<synchronous>, transform_indices = @transform_3, window_bounds = array<i64: 56, 96>}, {pipeline_mode = #tpu.pipeline_mode<synchronous>, transform_indices = @transform_4, window_bounds = array<i64: 1, 1>}]} {
    %c0 = arith.constant 0 : index
    %c0_0 = arith.constant 0 : index
    %0 = vector.load %arg1[%c0, %c0_0] : memref<37x32xf32, #tpu.memory_space<vmem>>, vector<8x32xf32>
    %c8 = arith.constant 8 : index
    %c0_1 = arith.constant 0 : index
    %1 = vector.load %arg1[%c8, %c0_1] : memref<37x32xf32, #tpu.memory_space<vmem>>, vector<1x8xf32>
    %c9 = arith.constant 9 : index
    %c0_2 = arith.constant 0 : index
    %2 = vector.load %arg1[%c9, %c0_2] : memref<37x32xf32, #tpu.memory_space<vmem>>, vector<28x32xf32>
    %c0_3 = arith.constant 0 : index
    %c0_4 = arith.constant 0 : index
    %3 = vector.load %arg4[%c0_3, %c0_4] : memref<56x96xf32, #tpu.memory_space<vmem>>, vector<8x32xf32>
    %4 = arith.addf %0, %3 : vector<8x32xf32>
    %c8_5 = arith.constant 8 : index
    %c0_6 = arith.constant 0 : index
    %5 = vector.load %arg4[%c8_5, %c0_6] : memref<56x96xf32, #tpu.memory_space<vmem>>, vector<1x32xf32>
    %c9_7 = arith.constant 9 : index
    %c0_8 = arith.constant 0 : index
    %6 = vector.load %arg4[%c9_7, %c0_8] : memref<56x96xf32, #tpu.memory_space<vmem>>, vector<1x32xf32>
    %cst = arith.constant dense<0.000000e+00> : vector<8xf32>
    %7 = vector.multi_reduction <add>, %4, %cst [1] : vector<8x32xf32> to vector<8xf32>
    %8 = vector.shape_cast %7 : vector<8xf32> to vector<8x1xf32>
    %cst_9 = arith.constant 3.200000e+01 : f32
    %9 = vector.broadcast %cst_9 : f32 to vector<8x1xf32>
    %10 = arith.divf %8, %9 : vector<8x1xf32>
    %11 = arith.mulf %4, %4 : vector<8x32xf32>
    %cst_10 = arith.constant dense<0.000000e+00> : vector<8xf32>
    %12 = vector.multi_reduction <add>, %11, %cst_10 [1] : vector<8x32xf32> to vector<8xf32>
    %13 = vector.shape_cast %12 : vector<8xf32> to vector<8x1xf32>
    %cst_11 = arith.constant 3.200000e+01 : f32
    %14 = vector.broadcast %cst_11 : f32 to vector<8x1xf32>
    %15 = arith.divf %13, %14 : vector<8x1xf32>
    %16 = arith.mulf %10, %10 : vector<8x1xf32>
    %17 = arith.subf %15, %16 : vector<8x1xf32>
    %18 = vector.broadcast %10 : vector<8x1xf32> to vector<8x32xf32>
    %19 = arith.subf %4, %18 : vector<8x32xf32>
    %cst_12 = arith.constant 9.99999974E-6 : f32
    %20 = vector.broadcast %cst_12 : f32 to vector<8x1xf32>
    %21 = arith.addf %17, %20 : vector<8x1xf32>
    %22 = math.rsqrt %21 : vector<8x1xf32>
    %23 = vector.broadcast %22 : vector<8x1xf32> to vector<8x32xf32>
    %24 = arith.mulf %19, %23 : vector<8x32xf32>
    %25 = vector.broadcast %5 : vector<1x32xf32> to vector<8x32xf32>
    %26 = arith.mulf %24, %25 : vector<8x32xf32>
    %27 = vector.broadcast %6 : vector<1x32xf32> to vector<8x32xf32>
    %28 = arith.addf %26, %27 : vector<8x32xf32>
    %c0_13 = arith.constant 0 : index
    %c0_14 = arith.constant 0 : index
    %c0_15 = arith.constant 0 : index
    %29 = vector.load %arg2[%c0_13, %c0_14, %c0_15] : memref<2x32x192xbf16, #tpu.memory_space<vmem>>, vector<1x32x192xbf16>
    %30 = vector.shape_cast %29 : vector<1x32x192xbf16> to vector<32x192xbf16>
    %31 = vector.extract_strided_slice %30 {offsets = [0, 0], sizes = [32, 96], strides = [1, 1]} : vector<32x192xbf16> to vector<32x96xbf16>
    %32 = vector.extract_strided_slice %30 {offsets = [0, 96], sizes = [32, 32], strides = [1, 1]} : vector<32x192xbf16> to vector<32x32xbf16>
    %33 = vector.extract_strided_slice %30 {offsets = [0, 128], sizes = [32, 64], strides = [1, 1]} : vector<32x192xbf16> to vector<32x64xbf16>
    %c0_16 = arith.constant 0 : index
    %c0_17 = arith.constant 0 : index
    %c0_18 = arith.constant 0 : index
    %34 = vector.load %arg3[%c0_16, %c0_17, %c0_18] : memref<2x64x32xbf16, #tpu.memory_space<vmem>>, vector<1x64x32xbf16>
    %35 = vector.shape_cast %34 : vector<1x64x32xbf16> to vector<64x32xbf16>
    %c10 = arith.constant 10 : index
    %c0_19 = arith.constant 0 : index
    %36 = vector.load %arg4[%c10, %c0_19] : memref<56x96xf32, #tpu.memory_space<vmem>>, vector<1x96xf32>
    %c11 = arith.constant 11 : index
    %c0_20 = arith.constant 0 : index
    %37 = vector.load %arg4[%c11, %c0_20] : memref<56x96xf32, #tpu.memory_space<vmem>>, vector<1x32xf32>
    %c12 = arith.constant 12 : index
    %c0_21 = arith.constant 0 : index
    %38 = vector.load %arg4[%c12, %c0_21] : memref<56x96xf32, #tpu.memory_space<vmem>>, vector<1x32xf32>
    %c13 = arith.constant 13 : index
    %c0_22 = arith.constant 0 : index
    %39 = vector.load %arg4[%c13, %c0_22] : memref<56x96xf32, #tpu.memory_space<vmem>>, vector<1x32xf32>
    %c14 = arith.constant 14 : index
    %c0_23 = arith.constant 0 : index
    %40 = vector.load %arg4[%c14, %c0_23] : memref<56x96xf32, #tpu.memory_space<vmem>>, vector<1x64xf32>
    %c15 = arith.constant 15 : index
    %c0_24 = arith.constant 0 : index
    %41 = vector.load %arg4[%c15, %c0_24] : memref<56x96xf32, #tpu.memory_space<vmem>>, vector<1x32xf32>
    %c16 = arith.constant 16 : index
    %c0_25 = arith.constant 0 : index
    %42 = vector.load %arg4[%c16, %c0_25] : memref<56x96xf32, #tpu.memory_space<vmem>>, vector<1x32xf32>
    %c17 = arith.constant 17 : index
    %c0_26 = arith.constant 0 : index
    %43 = vector.load %arg4[%c17, %c0_26] : memref<56x96xf32, #tpu.memory_space<vmem>>, vector<1x32xf32>
    %44 = arith.truncf %28 : vector<8x32xf32> to vector<8x32xbf16>
    %cst_27 = arith.constant dense<0.000000e+00> : vector<8x96xf32>
    %45 = tpu.matmul %44, %31, %cst_27 {dimension_numbers = #tpu.dot_dimension_numbers<[1], [0], [0], [1], [0, 0, 1, 1], [], []>} : vector<8x32xbf16>, vector<32x96xbf16>, vector<8x96xf32> -> vector<8x96xf32>
    %46 = vector.broadcast %36 : vector<1x96xf32> to vector<8x96xf32>
    %47 = arith.addf %45, %46 : vector<8x96xf32>
    %48 = vector.extract_strided_slice %47 {offsets = [0, 0], sizes = [8, 16], strides = [1, 1]} : vector<8x96xf32> to vector<8x16xf32>
    %49 = vector.extract_strided_slice %47 {offsets = [0, 32], sizes = [8, 16], strides = [1, 1]} : vector<8x96xf32> to vector<8x16xf32>
    %50 = vector.extract_strided_slice %47 {offsets = [0, 64], sizes = [8, 16], strides = [1, 1]} : vector<8x96xf32> to vector<8x16xf32>
    %cst_28 = arith.constant dense<0.000000e+00> : vector<8x8xf32>
    %51 = tpu.matmul %48, %49, %cst_28 {dimension_numbers = #tpu.dot_dimension_numbers<[1], [1], [0], [0], [0, 0, 1, 0], [], []>} : vector<8x16xf32>, vector<8x16xf32>, vector<8x8xf32> -> vector<8x8xf32>
    %52 = vector.broadcast %1 : vector<1x8xf32> to vector<8x8xf32>
    %53 = arith.addf %51, %52 : vector<8x8xf32>
    %cst_29 = arith.constant dense<0xFF800000> : vector<8xf32>
    %54 = vector.multi_reduction <maximumf>, %53, %cst_29 [1] : vector<8x8xf32> to vector<8xf32>
    %55 = vector.shape_cast %54 : vector<8xf32> to vector<8x1xf32>
    %56 = vector.broadcast %55 : vector<8x1xf32> to vector<8x8xf32>
    %57 = arith.subf %53, %56 : vector<8x8xf32>
    %58 = math.exp %57 : vector<8x8xf32>
    %cst_30 = arith.constant dense<0.000000e+00> : vector<8xf32>
    %59 = vector.multi_reduction <add>, %58, %cst_30 [1] : vector<8x8xf32> to vector<8xf32>
    %60 = vector.shape_cast %59 : vector<8xf32> to vector<8x1xf32>
    %61 = tpu.reciprocal %60 {approx = true} : vector<8x1xf32> -> vector<8x1xf32>
    %62 = vector.broadcast %61 : vector<8x1xf32> to vector<8x8xf32>
    %63 = arith.mulf %58, %62 : vector<8x8xf32>
    %cst_31 = arith.constant dense<0.000000e+00> : vector<8x16xf32>
    %64 = tpu.matmul %63, %50, %cst_31 {dimension_numbers = #tpu.dot_dimension_numbers<[1], [0], [0], [1], [0, 0, 1, 1], [], []>} : vector<8x8xf32>, vector<8x16xf32>, vector<8x16xf32> -> vector<8x16xf32>
    %65 = vector.extract_strided_slice %47 {offsets = [0, 16], sizes = [8, 16], strides = [1, 1]} : vector<8x96xf32> to vector<8x16xf32>
    %66 = vector.extract_strided_slice %47 {offsets = [0, 48], sizes = [8, 16], strides = [1, 1]} : vector<8x96xf32> to vector<8x16xf32>
    %67 = vector.extract_strided_slice %47 {offsets = [0, 80], sizes = [8, 16], strides = [1, 1]} : vector<8x96xf32> to vector<8x16xf32>
    %cst_32 = arith.constant dense<0.000000e+00> : vector<8x8xf32>
    %68 = tpu.matmul %65, %66, %cst_32 {dimension_numbers = #tpu.dot_dimension_numbers<[1], [1], [0], [0], [0, 0, 1, 0], [], []>} : vector<8x16xf32>, vector<8x16xf32>, vector<8x8xf32> -> vector<8x8xf32>
    %69 = vector.broadcast %1 : vector<1x8xf32> to vector<8x8xf32>
    %70 = arith.addf %68, %69 : vector<8x8xf32>
    %cst_33 = arith.constant dense<0xFF800000> : vector<8xf32>
    %71 = vector.multi_reduction <maximumf>, %70, %cst_33 [1] : vector<8x8xf32> to vector<8xf32>
    %72 = vector.shape_cast %71 : vector<8xf32> to vector<8x1xf32>
    %73 = vector.broadcast %72 : vector<8x1xf32> to vector<8x8xf32>
    %74 = arith.subf %70, %73 : vector<8x8xf32>
    %75 = math.exp %74 : vector<8x8xf32>
    %cst_34 = arith.constant dense<0.000000e+00> : vector<8xf32>
    %76 = vector.multi_reduction <add>, %75, %cst_34 [1] : vector<8x8xf32> to vector<8xf32>
    %77 = vector.shape_cast %76 : vector<8xf32> to vector<8x1xf32>
    %78 = tpu.reciprocal %77 {approx = true} : vector<8x1xf32> -> vector<8x1xf32>
    %79 = vector.broadcast %78 : vector<8x1xf32> to vector<8x8xf32>
    %80 = arith.mulf %75, %79 : vector<8x8xf32>
    %cst_35 = arith.constant dense<0.000000e+00> : vector<8x16xf32>
    %81 = tpu.matmul %80, %67, %cst_35 {dimension_numbers = #tpu.dot_dimension_numbers<[1], [0], [0], [1], [0, 0, 1, 1], [], []>} : vector<8x8xf32>, vector<8x16xf32>, vector<8x16xf32> -> vector<8x16xf32>
    %82 = tpu.concatenate %64, %81 in 1 : vector<8x16xf32>, vector<8x16xf32> -> vector<8x32xf32>
    %83 = arith.truncf %82 : vector<8x32xf32> to vector<8x32xbf16>
    %cst_36 = arith.constant dense<0.000000e+00> : vector<8x32xf32>
    %84 = tpu.matmul %83, %32, %cst_36 {dimension_numbers = #tpu.dot_dimension_numbers<[1], [0], [0], [1], [0, 0, 1, 1], [], []>} : vector<8x32xbf16>, vector<32x32xbf16>, vector<8x32xf32> -> vector<8x32xf32>
    %85 = vector.broadcast %37 : vector<1x32xf32> to vector<8x32xf32>
    %86 = arith.addf %84, %85 : vector<8x32xf32>
    %87 = arith.addf %86, %28 : vector<8x32xf32>
    %cst_37 = arith.constant dense<0.000000e+00> : vector<8xf32>
    %88 = vector.multi_reduction <add>, %87, %cst_37 [1] : vector<8x32xf32> to vector<8xf32>
    %89 = vector.shape_cast %88 : vector<8xf32> to vector<8x1xf32>
    %cst_38 = arith.constant 3.200000e+01 : f32
    %90 = vector.broadcast %cst_38 : f32 to vector<8x1xf32>
    %91 = arith.divf %89, %90 : vector<8x1xf32>
    %92 = arith.mulf %87, %87 : vector<8x32xf32>
    %cst_39 = arith.constant dense<0.000000e+00> : vector<8xf32>
    %93 = vector.multi_reduction <add>, %92, %cst_39 [1] : vector<8x32xf32> to vector<8xf32>
    %94 = vector.shape_cast %93 : vector<8xf32> to vector<8x1xf32>
    %cst_40 = arith.constant 3.200000e+01 : f32
    %95 = vector.broadcast %cst_40 : f32 to vector<8x1xf32>
    %96 = arith.divf %94, %95 : vector<8x1xf32>
    %97 = arith.mulf %91, %91 : vector<8x1xf32>
    %98 = arith.subf %96, %97 : vector<8x1xf32>
    %99 = vector.broadcast %91 : vector<8x1xf32> to vector<8x32xf32>
    %100 = arith.subf %87, %99 : vector<8x32xf32>
    %cst_41 = arith.constant 9.99999974E-6 : f32
    %101 = vector.broadcast %cst_41 : f32 to vector<8x1xf32>
    %102 = arith.addf %98, %101 : vector<8x1xf32>
    %103 = math.rsqrt %102 : vector<8x1xf32>
    %104 = vector.broadcast %103 : vector<8x1xf32> to vector<8x32xf32>
    %105 = arith.mulf %100, %104 : vector<8x32xf32>
    %106 = vector.broadcast %38 : vector<1x32xf32> to vector<8x32xf32>
    %107 = arith.mulf %105, %106 : vector<8x32xf32>
    %108 = vector.broadcast %39 : vector<1x32xf32> to vector<8x32xf32>
    %109 = arith.addf %107, %108 : vector<8x32xf32>
    %110 = arith.truncf %109 : vector<8x32xf32> to vector<8x32xbf16>
    %cst_42 = arith.constant dense<0.000000e+00> : vector<8x64xf32>
    %111 = tpu.matmul %110, %33, %cst_42 {dimension_numbers = #tpu.dot_dimension_numbers<[1], [0], [0], [1], [0, 0, 1, 1], [], []>} : vector<8x32xbf16>, vector<32x64xbf16>, vector<8x64xf32> -> vector<8x64xf32>
    %112 = vector.broadcast %40 : vector<1x64xf32> to vector<8x64xf32>
    %113 = arith.addf %111, %112 : vector<8x64xf32>
    %114 = arith.mulf %113, %113 : vector<8x64xf32>
    %115 = arith.mulf %113, %114 : vector<8x64xf32>
    %cst_43 = arith.constant 4.471500e-02 : f32
    %116 = vector.broadcast %cst_43 : f32 to vector<8x64xf32>
    %117 = arith.mulf %116, %115 : vector<8x64xf32>
    %118 = arith.addf %113, %117 : vector<8x64xf32>
    %cst_44 = arith.constant 0.797884583 : f32
    %119 = vector.broadcast %cst_44 : f32 to vector<8x64xf32>
    %120 = arith.mulf %119, %118 : vector<8x64xf32>
    %121 = math.tanh %120 : vector<8x64xf32>
    %cst_45 = arith.constant 1.000000e+00 : f32
    %122 = vector.broadcast %cst_45 : f32 to vector<8x64xf32>
    %123 = arith.addf %122, %121 : vector<8x64xf32>
    %cst_46 = arith.constant 5.000000e-01 : f32
    %124 = vector.broadcast %cst_46 : f32 to vector<8x64xf32>
    %125 = arith.mulf %124, %123 : vector<8x64xf32>
    %126 = arith.mulf %113, %125 : vector<8x64xf32>
    %127 = arith.truncf %126 : vector<8x64xf32> to vector<8x64xbf16>
    %cst_47 = arith.constant dense<0.000000e+00> : vector<8x32xf32>
    %128 = tpu.matmul %127, %35, %cst_47 {dimension_numbers = #tpu.dot_dimension_numbers<[1], [0], [0], [1], [0, 0, 1, 1], [], []>} : vector<8x64xbf16>, vector<64x32xbf16>, vector<8x32xf32> -> vector<8x32xf32>
    %129 = vector.broadcast %41 : vector<1x32xf32> to vector<8x32xf32>
    %130 = arith.addf %128, %129 : vector<8x32xf32>
    %131 = arith.addf %130, %109 : vector<8x32xf32>
    %cst_48 = arith.constant dense<0.000000e+00> : vector<8xf32>
    %132 = vector.multi_reduction <add>, %131, %cst_48 [1] : vector<8x32xf32> to vector<8xf32>
    %133 = vector.shape_cast %132 : vector<8xf32> to vector<8x1xf32>
    %cst_49 = arith.constant 3.200000e+01 : f32
    %134 = vector.broadcast %cst_49 : f32 to vector<8x1xf32>
    %135 = arith.divf %133, %134 : vector<8x1xf32>
    %136 = arith.mulf %131, %131 : vector<8x32xf32>
    %cst_50 = arith.constant dense<0.000000e+00> : vector<8xf32>
    %137 = vector.multi_reduction <add>, %136, %cst_50 [1] : vector<8x32xf32> to vector<8xf32>
    %138 = vector.shape_cast %137 : vector<8xf32> to vector<8x1xf32>
    %cst_51 = arith.constant 3.200000e+01 : f32
    %139 = vector.broadcast %cst_51 : f32 to vector<8x1xf32>
    %140 = arith.divf %138, %139 : vector<8x1xf32>
    %141 = arith.mulf %135, %135 : vector<8x1xf32>
    %142 = arith.subf %140, %141 : vector<8x1xf32>
    %143 = vector.broadcast %135 : vector<8x1xf32> to vector<8x32xf32>
    %144 = arith.subf %131, %143 : vector<8x32xf32>
    %cst_52 = arith.constant 9.99999974E-6 : f32
    %145 = vector.broadcast %cst_52 : f32 to vector<8x1xf32>
    %146 = arith.addf %142, %145 : vector<8x1xf32>
    %147 = math.rsqrt %146 : vector<8x1xf32>
    %148 = vector.broadcast %147 : vector<8x1xf32> to vector<8x32xf32>
    %149 = arith.mulf %144, %148 : vector<8x32xf32>
    %150 = vector.broadcast %42 : vector<1x32xf32> to vector<8x32xf32>
    %151 = arith.mulf %149, %150 : vector<8x32xf32>
    %152 = vector.broadcast %43 : vector<1x32xf32> to vector<8x32xf32>
    %153 = arith.addf %151, %152 : vector<8x32xf32>
    %c1 = arith.constant 1 : index
    %c0_53 = arith.constant 0 : index
    %c0_54 = arith.constant 0 : index
    %154 = vector.load %arg2[%c1, %c0_53, %c0_54] : memref<2x32x192xbf16, #tpu.memory_space<vmem>>, vector<1x32x192xbf16>
    %155 = vector.shape_cast %154 : vector<1x32x192xbf16> to vector<32x192xbf16>
    %156 = vector.extract_strided_slice %155 {offsets = [0, 0], sizes = [32, 96], strides = [1, 1]} : vector<32x192xbf16> to vector<32x96xbf16>
    %157 = vector.extract_strided_slice %155 {offsets = [0, 96], sizes = [32, 32], strides = [1, 1]} : vector<32x192xbf16> to vector<32x32xbf16>
    %158 = vector.extract_strided_slice %155 {offsets = [0, 128], sizes = [32, 64], strides = [1, 1]} : vector<32x192xbf16> to vector<32x64xbf16>
    %c1_55 = arith.constant 1 : index
    %c0_56 = arith.constant 0 : index
    %c0_57 = arith.constant 0 : index
    %159 = vector.load %arg3[%c1_55, %c0_56, %c0_57] : memref<2x64x32xbf16, #tpu.memory_space<vmem>>, vector<1x64x32xbf16>
    %160 = vector.shape_cast %159 : vector<1x64x32xbf16> to vector<64x32xbf16>
    %c18 = arith.constant 18 : index
    %c0_58 = arith.constant 0 : index
    %161 = vector.load %arg4[%c18, %c0_58] : memref<56x96xf32, #tpu.memory_space<vmem>>, vector<1x96xf32>
    %c19 = arith.constant 19 : index
    %c0_59 = arith.constant 0 : index
    %162 = vector.load %arg4[%c19, %c0_59] : memref<56x96xf32, #tpu.memory_space<vmem>>, vector<1x32xf32>
    %c20 = arith.constant 20 : index
    %c0_60 = arith.constant 0 : index
    %163 = vector.load %arg4[%c20, %c0_60] : memref<56x96xf32, #tpu.memory_space<vmem>>, vector<1x32xf32>
    %c21 = arith.constant 21 : index
    %c0_61 = arith.constant 0 : index
    %164 = vector.load %arg4[%c21, %c0_61] : memref<56x96xf32, #tpu.memory_space<vmem>>, vector<1x32xf32>
    %c22 = arith.constant 22 : index
    %c0_62 = arith.constant 0 : index
    %165 = vector.load %arg4[%c22, %c0_62] : memref<56x96xf32, #tpu.memory_space<vmem>>, vector<1x64xf32>
    %c23 = arith.constant 23 : index
    %c0_63 = arith.constant 0 : index
    %166 = vector.load %arg4[%c23, %c0_63] : memref<56x96xf32, #tpu.memory_space<vmem>>, vector<1x32xf32>
    %c24 = arith.constant 24 : index
    %c0_64 = arith.constant 0 : index
    %167 = vector.load %arg4[%c24, %c0_64] : memref<56x96xf32, #tpu.memory_space<vmem>>, vector<1x32xf32>
    %c25 = arith.constant 25 : index
    %c0_65 = arith.constant 0 : index
    %168 = vector.load %arg4[%c25, %c0_65] : memref<56x96xf32, #tpu.memory_space<vmem>>, vector<1x32xf32>
    %169 = arith.truncf %153 : vector<8x32xf32> to vector<8x32xbf16>
    %cst_66 = arith.constant dense<0.000000e+00> : vector<8x96xf32>
    %170 = tpu.matmul %169, %156, %cst_66 {dimension_numbers = #tpu.dot_dimension_numbers<[1], [0], [0], [1], [0, 0, 1, 1], [], []>} : vector<8x32xbf16>, vector<32x96xbf16>, vector<8x96xf32> -> vector<8x96xf32>
    %171 = vector.broadcast %161 : vector<1x96xf32> to vector<8x96xf32>
    %172 = arith.addf %170, %171 : vector<8x96xf32>
    %173 = vector.extract_strided_slice %172 {offsets = [0, 0], sizes = [8, 16], strides = [1, 1]} : vector<8x96xf32> to vector<8x16xf32>
    %174 = vector.extract_strided_slice %172 {offsets = [0, 32], sizes = [8, 16], strides = [1, 1]} : vector<8x96xf32> to vector<8x16xf32>
    %175 = vector.extract_strided_slice %172 {offsets = [0, 64], sizes = [8, 16], strides = [1, 1]} : vector<8x96xf32> to vector<8x16xf32>
    %cst_67 = arith.constant dense<0.000000e+00> : vector<8x8xf32>
    %176 = tpu.matmul %173, %174, %cst_67 {dimension_numbers = #tpu.dot_dimension_numbers<[1], [1], [0], [0], [0, 0, 1, 0], [], []>} : vector<8x16xf32>, vector<8x16xf32>, vector<8x8xf32> -> vector<8x8xf32>
    %177 = vector.broadcast %1 : vector<1x8xf32> to vector<8x8xf32>
    %178 = arith.addf %176, %177 : vector<8x8xf32>
    %cst_68 = arith.constant dense<0xFF800000> : vector<8xf32>
    %179 = vector.multi_reduction <maximumf>, %178, %cst_68 [1] : vector<8x8xf32> to vector<8xf32>
    %180 = vector.shape_cast %179 : vector<8xf32> to vector<8x1xf32>
    %181 = vector.broadcast %180 : vector<8x1xf32> to vector<8x8xf32>
    %182 = arith.subf %178, %181 : vector<8x8xf32>
    %183 = math.exp %182 : vector<8x8xf32>
    %cst_69 = arith.constant dense<0.000000e+00> : vector<8xf32>
    %184 = vector.multi_reduction <add>, %183, %cst_69 [1] : vector<8x8xf32> to vector<8xf32>
    %185 = vector.shape_cast %184 : vector<8xf32> to vector<8x1xf32>
    %186 = tpu.reciprocal %185 {approx = true} : vector<8x1xf32> -> vector<8x1xf32>
    %187 = vector.broadcast %186 : vector<8x1xf32> to vector<8x8xf32>
    %188 = arith.mulf %183, %187 : vector<8x8xf32>
    %cst_70 = arith.constant dense<0.000000e+00> : vector<8x16xf32>
    %189 = tpu.matmul %188, %175, %cst_70 {dimension_numbers = #tpu.dot_dimension_numbers<[1], [0], [0], [1], [0, 0, 1, 1], [], []>} : vector<8x8xf32>, vector<8x16xf32>, vector<8x16xf32> -> vector<8x16xf32>
    %190 = vector.extract_strided_slice %172 {offsets = [0, 16], sizes = [8, 16], strides = [1, 1]} : vector<8x96xf32> to vector<8x16xf32>
    %191 = vector.extract_strided_slice %172 {offsets = [0, 48], sizes = [8, 16], strides = [1, 1]} : vector<8x96xf32> to vector<8x16xf32>
    %192 = vector.extract_strided_slice %172 {offsets = [0, 80], sizes = [8, 16], strides = [1, 1]} : vector<8x96xf32> to vector<8x16xf32>
    %cst_71 = arith.constant dense<0.000000e+00> : vector<8x8xf32>
    %193 = tpu.matmul %190, %191, %cst_71 {dimension_numbers = #tpu.dot_dimension_numbers<[1], [1], [0], [0], [0, 0, 1, 0], [], []>} : vector<8x16xf32>, vector<8x16xf32>, vector<8x8xf32> -> vector<8x8xf32>
    %194 = vector.broadcast %1 : vector<1x8xf32> to vector<8x8xf32>
    %195 = arith.addf %193, %194 : vector<8x8xf32>
    %cst_72 = arith.constant dense<0xFF800000> : vector<8xf32>
    %196 = vector.multi_reduction <maximumf>, %195, %cst_72 [1] : vector<8x8xf32> to vector<8xf32>
    %197 = vector.shape_cast %196 : vector<8xf32> to vector<8x1xf32>
    %198 = vector.broadcast %197 : vector<8x1xf32> to vector<8x8xf32>
    %199 = arith.subf %195, %198 : vector<8x8xf32>
    %200 = math.exp %199 : vector<8x8xf32>
    %cst_73 = arith.constant dense<0.000000e+00> : vector<8xf32>
    %201 = vector.multi_reduction <add>, %200, %cst_73 [1] : vector<8x8xf32> to vector<8xf32>
    %202 = vector.shape_cast %201 : vector<8xf32> to vector<8x1xf32>
    %203 = tpu.reciprocal %202 {approx = true} : vector<8x1xf32> -> vector<8x1xf32>
    %204 = vector.broadcast %203 : vector<8x1xf32> to vector<8x8xf32>
    %205 = arith.mulf %200, %204 : vector<8x8xf32>
    %cst_74 = arith.constant dense<0.000000e+00> : vector<8x16xf32>
    %206 = tpu.matmul %205, %192, %cst_74 {dimension_numbers = #tpu.dot_dimension_numbers<[1], [0], [0], [1], [0, 0, 1, 1], [], []>} : vector<8x8xf32>, vector<8x16xf32>, vector<8x16xf32> -> vector<8x16xf32>
    %207 = tpu.concatenate %189, %206 in 1 : vector<8x16xf32>, vector<8x16xf32> -> vector<8x32xf32>
    %208 = arith.truncf %207 : vector<8x32xf32> to vector<8x32xbf16>
    %cst_75 = arith.constant dense<0.000000e+00> : vector<8x32xf32>
    %209 = tpu.matmul %208, %157, %cst_75 {dimension_numbers = #tpu.dot_dimension_numbers<[1], [0], [0], [1], [0, 0, 1, 1], [], []>} : vector<8x32xbf16>, vector<32x32xbf16>, vector<8x32xf32> -> vector<8x32xf32>
    %210 = vector.broadcast %162 : vector<1x32xf32> to vector<8x32xf32>
    %211 = arith.addf %209, %210 : vector<8x32xf32>
    %212 = arith.addf %211, %153 : vector<8x32xf32>
    %cst_76 = arith.constant dense<0.000000e+00> : vector<8xf32>
    %213 = vector.multi_reduction <add>, %212, %cst_76 [1] : vector<8x32xf32> to vector<8xf32>
    %214 = vector.shape_cast %213 : vector<8xf32> to vector<8x1xf32>
    %cst_77 = arith.constant 3.200000e+01 : f32
    %215 = vector.broadcast %cst_77 : f32 to vector<8x1xf32>
    %216 = arith.divf %214, %215 : vector<8x1xf32>
    %217 = arith.mulf %212, %212 : vector<8x32xf32>
    %cst_78 = arith.constant dense<0.000000e+00> : vector<8xf32>
    %218 = vector.multi_reduction <add>, %217, %cst_78 [1] : vector<8x32xf32> to vector<8xf32>
    %219 = vector.shape_cast %218 : vector<8xf32> to vector<8x1xf32>
    %cst_79 = arith.constant 3.200000e+01 : f32
    %220 = vector.broadcast %cst_79 : f32 to vector<8x1xf32>
    %221 = arith.divf %219, %220 : vector<8x1xf32>
    %222 = arith.mulf %216, %216 : vector<8x1xf32>
    %223 = arith.subf %221, %222 : vector<8x1xf32>
    %224 = vector.broadcast %216 : vector<8x1xf32> to vector<8x32xf32>
    %225 = arith.subf %212, %224 : vector<8x32xf32>
    %cst_80 = arith.constant 9.99999974E-6 : f32
    %226 = vector.broadcast %cst_80 : f32 to vector<8x1xf32>
    %227 = arith.addf %223, %226 : vector<8x1xf32>
    %228 = math.rsqrt %227 : vector<8x1xf32>
    %229 = vector.broadcast %228 : vector<8x1xf32> to vector<8x32xf32>
    %230 = arith.mulf %225, %229 : vector<8x32xf32>
    %231 = vector.broadcast %163 : vector<1x32xf32> to vector<8x32xf32>
    %232 = arith.mulf %230, %231 : vector<8x32xf32>
    %233 = vector.broadcast %164 : vector<1x32xf32> to vector<8x32xf32>
    %234 = arith.addf %232, %233 : vector<8x32xf32>
    %235 = arith.truncf %234 : vector<8x32xf32> to vector<8x32xbf16>
    %cst_81 = arith.constant dense<0.000000e+00> : vector<8x64xf32>
    %236 = tpu.matmul %235, %158, %cst_81 {dimension_numbers = #tpu.dot_dimension_numbers<[1], [0], [0], [1], [0, 0, 1, 1], [], []>} : vector<8x32xbf16>, vector<32x64xbf16>, vector<8x64xf32> -> vector<8x64xf32>
    %237 = vector.broadcast %165 : vector<1x64xf32> to vector<8x64xf32>
    %238 = arith.addf %236, %237 : vector<8x64xf32>
    %239 = arith.mulf %238, %238 : vector<8x64xf32>
    %240 = arith.mulf %238, %239 : vector<8x64xf32>
    %cst_82 = arith.constant 4.471500e-02 : f32
    %241 = vector.broadcast %cst_82 : f32 to vector<8x64xf32>
    %242 = arith.mulf %241, %240 : vector<8x64xf32>
    %243 = arith.addf %238, %242 : vector<8x64xf32>
    %cst_83 = arith.constant 0.797884583 : f32
    %244 = vector.broadcast %cst_83 : f32 to vector<8x64xf32>
    %245 = arith.mulf %244, %243 : vector<8x64xf32>
    %246 = math.tanh %245 : vector<8x64xf32>
    %cst_84 = arith.constant 1.000000e+00 : f32
    %247 = vector.broadcast %cst_84 : f32 to vector<8x64xf32>
    %248 = arith.addf %247, %246 : vector<8x64xf32>
    %cst_85 = arith.constant 5.000000e-01 : f32
    %249 = vector.broadcast %cst_85 : f32 to vector<8x64xf32>
    %250 = arith.mulf %249, %248 : vector<8x64xf32>
    %251 = arith.mulf %238, %250 : vector<8x64xf32>
    %252 = arith.truncf %251 : vector<8x64xf32> to vector<8x64xbf16>
    %cst_86 = arith.constant dense<0.000000e+00> : vector<8x32xf32>
    %253 = tpu.matmul %252, %160, %cst_86 {dimension_numbers = #tpu.dot_dimension_numbers<[1], [0], [0], [1], [0, 0, 1, 1], [], []>} : vector<8x64xbf16>, vector<64x32xbf16>, vector<8x32xf32> -> vector<8x32xf32>
    %254 = vector.broadcast %166 : vector<1x32xf32> to vector<8x32xf32>
    %255 = arith.addf %253, %254 : vector<8x32xf32>
    %256 = arith.addf %255, %234 : vector<8x32xf32>
    %cst_87 = arith.constant dense<0.000000e+00> : vector<8xf32>
    %257 = vector.multi_reduction <add>, %256, %cst_87 [1] : vector<8x32xf32> to vector<8xf32>
    %258 = vector.shape_cast %257 : vector<8xf32> to vector<8x1xf32>
    %cst_88 = arith.constant 3.200000e+01 : f32
    %259 = vector.broadcast %cst_88 : f32 to vector<8x1xf32>
    %260 = arith.divf %258, %259 : vector<8x1xf32>
    %261 = arith.mulf %256, %256 : vector<8x32xf32>
    %cst_89 = arith.constant dense<0.000000e+00> : vector<8xf32>
    %262 = vector.multi_reduction <add>, %261, %cst_89 [1] : vector<8x32xf32> to vector<8xf32>
    %263 = vector.shape_cast %262 : vector<8xf32> to vector<8x1xf32>
    %cst_90 = arith.constant 3.200000e+01 : f32
    %264 = vector.broadcast %cst_90 : f32 to vector<8x1xf32>
    %265 = arith.divf %263, %264 : vector<8x1xf32>
    %266 = arith.mulf %260, %260 : vector<8x1xf32>
    %267 = arith.subf %265, %266 : vector<8x1xf32>
    %268 = vector.broadcast %260 : vector<8x1xf32> to vector<8x32xf32>
    %269 = arith.subf %256, %268 : vector<8x32xf32>
    %cst_91 = arith.constant 9.99999974E-6 : f32
    %270 = vector.broadcast %cst_91 : f32 to vector<8x1xf32>
    %271 = arith.addf %267, %270 : vector<8x1xf32>
    %272 = math.rsqrt %271 : vector<8x1xf32>
    %273 = vector.broadcast %272 : vector<8x1xf32> to vector<8x32xf32>
    %274 = arith.mulf %269, %273 : vector<8x32xf32>
    %275 = vector.broadcast %167 : vector<1x32xf32> to vector<8x32xf32>
    %276 = arith.mulf %274, %275 : vector<8x32xf32>
    %277 = vector.broadcast %168 : vector<1x32xf32> to vector<8x32xf32>
    %278 = arith.addf %276, %277 : vector<8x32xf32>
    %279 = vector.extract_strided_slice %278 {offsets = [0, 0], sizes = [1, 32], strides = [1, 1]} : vector<8x32xf32> to vector<1x32xf32>
    %c26 = arith.constant 26 : index
    %c0_92 = arith.constant 0 : index
    %280 = vector.load %arg4[%c26, %c0_92] : memref<56x96xf32, #tpu.memory_space<vmem>>, vector<1x32xf32>
    %c27 = arith.constant 27 : index
    %c0_93 = arith.constant 0 : index
    %281 = vector.load %arg4[%c27, %c0_93] : memref<56x96xf32, #tpu.memory_space<vmem>>, vector<1x1xf32>
    %c28 = arith.constant 28 : index
    %c0_94 = arith.constant 0 : index
    %282 = vector.load %arg4[%c28, %c0_94] : memref<56x96xf32, #tpu.memory_space<vmem>>, vector<28x32xf32>
    %283 = arith.mulf %279, %280 : vector<1x32xf32>
    %284 = arith.mulf %2, %282 : vector<28x32xf32>
    %cst_95 = arith.constant dense<0.000000e+00> : vector<32xf32>
    %285 = vector.multi_reduction <add>, %284, %cst_95 [0] : vector<28x32xf32> to vector<32xf32>
    %286 = vector.shape_cast %285 : vector<32xf32> to vector<1x32xf32>
    %287 = arith.addf %283, %286 : vector<1x32xf32>
    %cst_96 = arith.constant dense<0.000000e+00> : vector<1xf32>
    %288 = vector.multi_reduction <add>, %287, %cst_96 [1] : vector<1x32xf32> to vector<1xf32>
    %289 = vector.shape_cast %288 : vector<1xf32> to vector<1x1xf32>
    %290 = arith.addf %289, %281 : vector<1x1xf32>
    %291 = arith.negf %290 : vector<1x1xf32>
    %292 = math.exp %291 : vector<1x1xf32>
    %cst_97 = arith.constant 1.000000e+00 : f32
    %293 = vector.broadcast %cst_97 : f32 to vector<1x1xf32>
    %294 = arith.addf %293, %292 : vector<1x1xf32>
    %295 = arith.divf %293, %294 : vector<1x1xf32>
    %c0_98 = arith.constant 0 : index
    %c0_99 = arith.constant 0 : index
    %296 = vector.load %arg5[%c0_98, %c0_99] : memref<1x1xf32, #tpu.memory_space<vmem>>, vector<1x1xf32>
    tpu.vector_store %arg5[%c0_98, %c0_99], %295 {strides = array<i32>} : memref<1x1xf32, #tpu.memory_space<vmem>>, vector<1x1xf32>,
    return
  }
  func.func @transform_0(%arg0: i32) -> (i32, i32) {
    %c0_i32 = arith.constant 0 : i32
    %c0_i32_0 = arith.constant 0 : i32
    %c0_i32_1 = arith.constant 0 : i32
    return %c0_i32, %c0_i32_0 : i32, i32
  }
  func.func @transform_1(%arg0: i32) -> (i32, i32, i32) {
    %c0_i32 = arith.constant 0 : i32
    %c0_i32_0 = arith.constant 0 : i32
    %c0_i32_1 = arith.constant 0 : i32
    %c0_i32_2 = arith.constant 0 : i32
    return %c0_i32, %c0_i32_0, %c0_i32_1 : i32, i32, i32
  }
  func.func @transform_2(%arg0: i32) -> (i32, i32, i32) {
    %c0_i32 = arith.constant 0 : i32
    %c0_i32_0 = arith.constant 0 : i32
    %c0_i32_1 = arith.constant 0 : i32
    %c0_i32_2 = arith.constant 0 : i32
    return %c0_i32, %c0_i32_0, %c0_i32_1 : i32, i32, i32
  }
  func.func @transform_3(%arg0: i32) -> (i32, i32) {
    %c0_i32 = arith.constant 0 : i32
    %c0_i32_0 = arith.constant 0 : i32
    %c0_i32_1 = arith.constant 0 : i32
    return %c0_i32, %c0_i32_0 : i32, i32
  }
  func.func @transform_4(%arg0: i32) -> (i32, i32) {
    %c0_i32 = arith.constant 0 : i32
    %c0_i32_0 = arith.constant 0 : i32
    %c0_i32_1 = arith.constant 0 : i32
    return %c0_i32, %c0_i32_0 : i32, i32
  }
}

</mosaic_0001>

<llo_original>
// kernel: roberta_hiagm_forward.1
$region0: #{roberta_hiagm_forward.1}
  #allocation0 [shape = 'u32[]', space=smem, size = 0x4, offset = 0x4, fixed_abs, tag = 'smem constant byte address 0x4 - core index']
  #allocation1 [shape = 'u32[144,128]{1,0:T(1,128)}', space=vmem, size = 0x12000, scoped, tag = 'internal scratch']
  %s0 = inlined_call_operand.vmem [shape: f32[37,32], index: 0, kind: input, shape index: {}]
  %s1 = inlined_call_operand.vmem [shape: bf16[2,32,192], index: 1, kind: input, shape index: {}]
  %s2 = inlined_call_operand.vmem [shape: bf16[2,64,32], index: 2, kind: input, shape index: {}]
  %s3 = inlined_call_operand.vmem [shape: f32[56,96], index: 3, kind: input, shape index: {}]
  %s4 = inlined_call_operand.hbm [shape: f32[1,1], index: 4, kind: output, shape index: {}]
  %s5 = sld [smem:[#allocation0]]
  $region26: #{roberta_hiagm_forward.1} parent=0
    _
  %s7 = ssub.s32 1, %s5
  %s8 = scalar_select 0, %s7, %s5
  $region1: #{roberta_hiagm_forward.1} parent=0
    #allocation2 [shape = 'u8[512]{0}', space=vmem, size = 0x400, scoped, tag = 'output window, operand 0, single buffered']
    #allocation3 [shape = 's32[1]{0}', space=sflag, size = 0x4, scoped, tag = 'scoped memory for roberta_hiagm_forward.1']
    %9 = vsyncpa [#allocation3], 0
    // Predicated region
    $region2: #{roberta_hiagm_forward.1} parent=1 // pred_check
      _
    $region3: #{roberta_hiagm_forward.1} parent=1 // pred_check_branch
      %11 = sbr.rel (0) target = $region5
    $region4: #{roberta_hiagm_forward.1} parent=1 // pred_region
      _
    $region5: #{roberta_hiagm_forward.1} parent=1 // pred_fallthru
      _
    // Predicated region
    $region6: #{roberta_hiagm_forward.1} parent=1 // pred_check
      _
    $region7: #{roberta_hiagm_forward.1} parent=1 // pred_check_branch
      %13 = sbr.rel (0) target = $region9
    $region8: #{roberta_hiagm_forward.1} parent=1 // pred_region
      _
    $region9: #{roberta_hiagm_forward.1} parent=1 // pred_fallthru
      _
    // Predicated region
    $region10: #{roberta_hiagm_forward.1} parent=1 // pred_check
      _
    $region11: #{roberta_hiagm_forward.1} parent=1 // pred_check_branch
      %15 = sbr.rel (0) target = $region13
    $region12: #{roberta_hiagm_forward.1} parent=1 // pred_region
      _
    $region13: #{roberta_hiagm_forward.1} parent=1 // pred_fallthru
      _
    // Predicated region
    $region14: #{roberta_hiagm_forward.1} parent=1 // pred_check
      _
    $region15: #{roberta_hiagm_forward.1} parent=1 // pred_check_branch
      %17 = sbr.rel (0) target = $region17
    $region16: #{roberta_hiagm_forward.1} parent=1 // pred_region
      _
    $region17: #{roberta_hiagm_forward.1} parent=1 // pred_fallthru
      _
    %v19 = vld [vmem:[%s0] sm:$0xff]
    %v20 = vld [vmem:[%s0 + $0x8] sm:$0x1]
    %v21 = vld [vmem:[%s0 + $0x9] sm:$0xff]
    %v22 = vld [vmem:[%s0 + $0x11] sm:$0xff]
    %v23 = vld [vmem:[%s0 + $0x19] sm:$0xff]
    %v24 = vld [vmem:[%s0 + $0x21] sm:$0xf]
    %v25 = vld [vmem:[%s3] sm:$0xff]
    %v26 = vadd.f32 %v19, %v25
    %v27 = vld [vmem:[%s3 + $0x8] sm:$0x1]
    %v28 = vld [vmem:[%s3 + $0x9] sm:$0x1]
    %vm29 = vcmask 261120
    %v30 = vsel %vm29, %v26, 0.0
    %31 = vadd.xlane.f32.xlu0 %v30
    %v32 = vpop.xlane.xlu0 %31
    %v33 = vrcp.pop 32.0
    %v34 = vmul.f32 %v32, %v33
    %v35 = vmul.f32 %v26, %v26
    %v36 = vsel %vm29, %v35, 0.0
    %37 = vadd.xlane.f32.xlu0 %v36
    %v38 = vpop.xlane.xlu0 %37
    %v39 = vmul.f32 %v38, %v33
    %v40 = vmul.f32 %v34, %v34
    %v41 = vsub.f32 %v39, %v40
    %v42 = vsub.f32 %v26, %v34
    %v43 = vadd.f32 %v41, 1e-05
    %v44 = vrsqrt.pop %v43
    %v45 = vmul.f32 %v42, %v44
    %v46 = vlaneseq
    %v47 = vshrl.u32 %v46, 7
    %v48 = vsub.s32 0, %v47
    %v49 = vrot.slane %v27, %v48
    %v50 = vmul.f32 %v45, %v49
    %v51 = vlaneseq
    %v52 = vshrl.u32 %v51, 7
    %v53 = vsub.s32 0, %v52
    %v54 = vrot.slane %v28, %v53
    %v55 = vadd.f32 %v50, %v54
    %v56 = vld [vmem:[%s1] sm:$0xff]
    %v57 = vld [vmem:[%s1 + $0x8] sm:$0xff]
    %v58 = vld [vmem:[%s1 + $0x10] sm:$0xff]
    %v59 = vld [vmem:[%s1 + $0x18] sm:$0xff]
    %v60 = vld [vmem:[%s2] sm:$0xf]
    %v61 = vld [vmem:[%s2 + $0x4] sm:$0xf]
    %v62 = vld [vmem:[%s2 + $0x8] sm:$0xf]
    %v63 = vld [vmem:[%s2 + $0xc] sm:$0xf]
    %v64 = vld [vmem:[%s2 + $0x10] sm:$0xf]
    %v65 = vld [vmem:[%s2 + $0x14] sm:$0xf]
    %v66 = vld [vmem:[%s2 + $0x18] sm:$0xf]
    %v67 = vld [vmem:[%s2 + $0x1c] sm:$0xf]
    %v68 = vld [vmem:[%s3 + $0xa] sm:$0x1]
    %v69 = vld [vmem:[%s3 + $0xb] sm:$0x1]
    %v70 = vld [vmem:[%s3 + $0xc] sm:$0x1]
    %v71 = vld [vmem:[%s3 + $0xd] sm:$0x1]
    %v72 = vld [vmem:[%s3 + $0xe] sm:$0x1]
    %v73 = vld [vmem:[%s3 + $0xf] sm:$0x1]
    %v74 = vld [vmem:[%s3 + $0x10] sm:$0x1]
    %v75 = vld [vmem:[%s3 + $0x11] sm:$0x1]
    %v76 = vpack.c.bf16 %v55, %v55
    %v77 = vlaneseq
    %v78 = vshrl.u32 %v77, 7
    %v79 = vsub.s32 0, %v78
    %v80 = vrot.slane %v68, %v79
    %v85 = vunpack.c.l.b16 %v56
    %v86 = vunpack.c.l.b16 %v57
    %v87 = vunpack.c.l.b16 %v58
    %v88 = vunpack.c.l.b16 %v59
    %v89 = vpack.c.b16 %v86, %v85
    %v90 = vpack.c.b16 %v88, %v87
    %v94 = vsel %vm29, %v76, 0
    %96 = vmatprep.subr.bf16.mxu0 0
    %97 = vmatpush1.bf16.msra.mxu0 %v89
    %98 = vmatprep.subr.bf16.mxu0 0
    %99 = vmatpush1.bf16.msra.mxu0 %v90
    %100 = vmatprep.subr.bf16.mxu0 0
    %101 = vmatpush1.bf16.msra.mxu0 0
    %102 = vmatprep.subr.bf16.mxu0 0
    %103 = vmatpush1.bf16.msra.mxu0 0
    %104 = vmatprep.subr.bf16.mxu0 0
    %105 = vmatpush1.bf16.msra.mxu0 0
    %106 = vmatprep.subr.bf16.mxu0 0
    %107 = vmatpush1.bf16.msra.mxu0 0
    %108 = vmatprep.subr.bf16.mxu0 0
    %109 = vmatpush1.bf16.msra.mxu0 0
    %110 = vmatprep.subr.bf16.mxu0 0
    %111 = vmatpush1.bf16.msra.mxu0 0
    %112 = vmatprep.subr.bf16.mxu0 0
    %113 = vmatpush1.bf16.msra.mxu0 0
    %114 = vmatprep.subr.bf16.mxu0 0
    %115 = vmatpush1.bf16.msra.mxu0 0
    %116 = vmatprep.subr.bf16.mxu0 0
    %117 = vmatpush1.bf16.msra.mxu0 0
    %118 = vmatprep.subr.bf16.mxu0 0
    %119 = vmatpush1.bf16.msra.mxu0 0
    %120 = vmatprep.subr.bf16.mxu0 0
    %121 = vmatpush1.bf16.msra.mxu0 0
    %122 = vmatprep.subr.bf16.mxu0 0
    %123 = vmatpush1.bf16.msra.mxu0 0
    %124 = vmatprep.subr.bf16.mxu0 0
    %125 = vmatpush1.bf16.msra.mxu0 0
    %126 = vmatprep.subr.bf16.mxu0 0
    %127 = vmatpush1.bf16.msra.mxu0 0
    %128 = vmatprep.mubr.bf16.mxu0 0
    %129 = vmatmul.mubr.bf16.gmra.mrb[0].mxu0 %v94
    %v130 = vpop.f32.mrb[0].mxu0
    %v131 = vadd.f32 %v80, %v130
    %v132 = vpop.f32.mrb[0].mxu0
    %v133 = vpop.f32.mrb[0].mxu0
    %v134 = vpop.f32.mrb[0].mxu0
    %135 = vdwg.mxu0
    %v136 = vlaneseq
    %v137 = vshrl.u32 %v136, 7
    %v138 = vsub.s32 0, %v137
    %v139 = vrot.slane %v20, %v138
    %141 = vrot.lane.b32.xlu0 %v131, 96
    %v142 = vpop.permute.xlu0 %141
    %vm143 = vcmask 130048
    %v144 = vsel %vm143, %v131, 0
    %v146 = vsel %vm143, %v142, 0
    %148 = vmatprep.subr.mxu0 0.0
    %149 = vmatpush1.xpose.msra.mxu0 %v146
    %150 = vmatprep.subr.mxu0 0.0
    %151 = vmatpush1.xpose.msra.mxu0 0.0
    %152 = vmatprep.subr.mxu0 0.0
    %153 = vmatpush1.xpose.msra.mxu0 0.0
    %154 = vmatprep.subr.mxu0 0.0
    %155 = vmatpush1.xpose.msra.mxu0 0.0
    %156 = vmatprep.subr.mxu0 0.0
    %157 = vmatpush1.xpose.msra.mxu0 0.0
    %158 = vmatprep.subr.mxu0 0.0
    %159 = vmatpush1.xpose.msra.mxu0 0.0
    %160 = vmatprep.subr.mxu0 0.0
    %161 = vmatpush1.xpose.msra.mxu0 0.0
    %162 = vmatprep.subr.mxu0 0.0
    %163 = vmatpush1.xpose.msra.mxu0 0.0
    %164 = vmatprep.subr.mxu0 0.0
    %165 = vmatpush1.xpose.msra.mxu0 0.0
    %166 = vmatprep.subr.mxu0 0.0
    %167 = vmatpush1.xpose.msra.mxu0 0.0
    %168 = vmatprep.subr.mxu0 0.0
    %169 = vmatpush1.xpose.msra.mxu0 0.0
    %170 = vmatprep.subr.mxu0 0.0
    %171 = vmatpush1.xpose.msra.mxu0 0.0
    %172 = vmatprep.subr.mxu0 0.0
    %173 = vmatpush1.xpose.msra.mxu0 0.0
    %174 = vmatprep.subr.mxu0 0.0
    %175 = vmatpush1.xpose.msra.mxu0 0.0
    %176 = vmatprep.subr.mxu0 0.0
    %177 = vmatpush1.xpose.msra.mxu0 0.0
    %178 = vmatprep.subr.mxu0 0.0
    %179 = vmatpush1.xpose.msra.mxu0 0.0
    %180 = vmatprep.subr.mxu0 0.0
    %181 = vmatpush1.xpose.msra.mxu0 0.0
    %182 = vmatprep.subr.mxu0 0.0
    %183 = vmatpush1.xpose.msra.mxu0 0.0
    %184 = vmatprep.subr.mxu0 0.0
    %185 = vmatpush1.xpose.msra.mxu0 0.0
    %186 = vmatprep.subr.mxu0 0.0
    %187 = vmatpush1.xpose.msra.mxu0 0.0
    %188 = vmatprep.subr.mxu0 0.0
    %189 = vmatpush1.xpose.msra.mxu0 0.0
    %190 = vmatprep.subr.mxu0 0.0
    %191 = vmatpush1.xpose.msra.mxu0 0.0
    %192 = vmatprep.subr.mxu0 0.0
    %193 = vmatpush1.xpose.msra.mxu0 0.0
    %194 = vmatprep.subr.mxu0 0.0
    %195 = vmatpush1.xpose.msra.mxu0 0.0
    %196 = vmatprep.subr.mxu0 0.0
    %197 = vmatpush1.xpose.msra.mxu0 0.0
    %198 = vmatprep.subr.mxu0 0.0
    %199 = vmatpush1.xpose.msra.mxu0 0.0
    %200 = vmatprep.subr.mxu0 0.0
    %201 = vmatpush1.xpose.msra.mxu0 0.0
    %202 = vmatprep.subr.mxu0 0.0
    %203 = vmatpush1.xpose.msra.mxu0 0.0
    %204 = vmatprep.subr.mxu0 0.0
    %205 = vmatpush1.xpose.msra.mxu0 0.0
    %206 = vmatprep.subr.mxu0 0.0
    %207 = vmatpush1.xpose.msra.mxu0 0.0
    %208 = vmatprep.subr.mxu0 0.0
    %209 = vmatpush1.xpose.msra.mxu0 0.0
    %210 = vmatprep.subr.mxu0 0.0
    %211 = vmatpush1.xpose.msra.mxu0 0.0
    %212 = vmatprep.mubr.f32.mxu0 0.0
    %213 = vmatmul.mubr.f32.gmra.mrb[0].mxu0 %v144
    %v214 = vpop.f32.mrb[0].mxu0
    %v215 = vadd.f32 %v139, %v214
    %v216 = vpop.f32.mrb[0].mxu0
    %217 = vdwg.mxu0
    %vm218 = vcmask 64512
    %v219 = vsel %vm218, %v215, -inf
    %220 = vmax.xlane.f32.xlu0 %v219
    %v221 = vpop.xlane.xlu0 %220
    %v222 = vsub.f32 %v215, %v221
    %v223 = vmul.f32 %v222, 1.442695
    %v224 = vpow.pop %v223
    %v225 = vsel %vm218, %v224, 0.0
    %226 = vadd.xlane.f32.xlu0 %v225
    %v227 = vpop.xlane.xlu0 %226
    %v228 = vrcp.pop %v227
    %v229 = vmul.f32 %v224, %v228
    %230 = vrot.lane.b32.xlu0 %v131, 64
    %v231 = vpop.permute.xlu0 %230
    %v234 = vsel %vm218, %v229, 0
    %236 = vmatprep.subr.mxu0 0.0
    %237 = vmatpush1.msra.mxu0 %v231
    %238 = vmatprep.subr.mxu0 0.0
    %239 = vmatpush1.msra.mxu0 0.0
    %240 = vmatprep.subr.mxu0 0.0
    %241 = vmatpush1.msra.mxu0 0.0
    %242 = vmatprep.subr.mxu0 0.0
    %243 = vmatpush1.msra.mxu0 0.0
    %244 = vmatprep.subr.mxu0 0.0
    %245 = vmatpush1.msra.mxu0 0.0
    %246 = vmatprep.subr.mxu0 0.0
    %247 = vmatpush1.msra.mxu0 0.0
    %248 = vmatprep.subr.mxu0 0.0
    %249 = vmatpush1.msra.mxu0 0.0
    %250 = vmatprep.subr.mxu0 0.0
    %251 = vmatpush1.msra.mxu0 0.0
    %252 = vmatprep.subr.mxu0 0.0
    %253 = vmatpush1.msra.mxu0 0.0
    %254 = vmatprep.subr.mxu0 0.0
    %255 = vmatpush1.msra.mxu0 0.0
    %256 = vmatprep.subr.mxu0 0.0
    %257 = vmatpush1.msra.mxu0 0.0
    %258 = vmatprep.subr.mxu0 0.0
    %259 = vmatpush1.msra.mxu0 0.0
    %260 = vmatprep.subr.mxu0 0.0
    %261 = vmatpush1.msra.mxu0 0.0
    %262 = vmatprep.subr.mxu0 0.0
    %263 = vmatpush1.msra.mxu0 0.0
    %264 = vmatprep.subr.mxu0 0.0
    %265 = vmatpush1.msra.mxu0 0.0
    %266 = vmatprep.subr.mxu0 0.0
    %267 = vmatpush1.msra.mxu0 0.0
    %268 = vmatprep.subr.mxu0 0.0
    %269 = vmatpush1.msra.mxu0 0.0
    %270 = vmatprep.subr.mxu0 0.0
    %271 = vmatpush1.msra.mxu0 0.0
    %272 = vmatprep.subr.mxu0 0.0
    %273 = vmatpush1.msra.mxu0 0.0
    %274 = vmatprep.subr.mxu0 0.0
    %275 = vmatpush1.msra.mxu0 0.0
    %276 = vmatprep.subr.mxu0 0.0
    %277 = vmatpush1.msra.mxu0 0.0
    %278 = vmatprep.subr.mxu0 0.0
    %279 = vmatpush1.msra.mxu0 0.0
    %280 = vmatprep.subr.mxu0 0.0
    %281 = vmatpush1.msra.mxu0 0.0
    %282 = vmatprep.subr.mxu0 0.0
    %283 = vmatpush1.msra.mxu0 0.0
    %284 = vmatprep.subr.mxu0 0.0
    %285 = vmatpush1.msra.mxu0 0.0
    %286 = vmatprep.subr.mxu0 0.0
    %287 = vmatpush1.msra.mxu0 0.0
    %288 = vmatprep.subr.mxu0 0.0
    %289 = vmatpush1.msra.mxu0 0.0
    %290 = vmatprep.subr.mxu0 0.0
    %291 = vmatpush1.msra.mxu0 0.0
    %292 = vmatprep.subr.mxu0 0.0
    %293 = vmatpush1.msra.mxu0 0.0
    %294 = vmatprep.subr.mxu0 0.0
    %295 = vmatpush1.msra.mxu0 0.0
    %296 = vmatprep.subr.mxu0 0.0
    %297 = vmatpush1.msra.mxu0 0.0
    %298 = vmatprep.subr.mxu0 0.0
    %299 = vmatpush1.msra.mxu0 0.0
    %300 = vmatprep.mubr.f32.mxu0 0.0
    %301 = vmatmul.mubr.f32.gmra.mrb[0].mxu0 %v234
    %v302 = vpop.f32.mrb[0].mxu0
    %v303 = vadd.f32 0.0, %v302
    %v304 = vpop.f32.mrb[0].mxu0
    %305 = vdwg.mxu0
    %306 = vrot.lane.b32.xlu0 %v131, 112
    %v307 = vpop.permute.xlu0 %306
    %308 = vrot.lane.b32.xlu0 %v131, 80
    %v309 = vpop.permute.xlu0 %308
    %v310 = vsel %vm143, %v307, 0
    %v312 = vsel %vm143, %v309, 0
    %314 = vmatprep.subr.mxu0 0.0
    %315 = vmatpush1.xpose.msra.mxu0 %v312
    %316 = vmatprep.subr.mxu0 0.0
    %317 = vmatpush1.xpose.msra.mxu0 0.0
    %318 = vmatprep.subr.mxu0 0.0
    %319 = vmatpush1.xpose.msra.mxu0 0.0
    %320 = vmatprep.subr.mxu0 0.0
    %321 = vmatpush1.xpose.msra.mxu0 0.0
    %322 = vmatprep.subr.mxu0 0.0
    %323 = vmatpush1.xpose.msra.mxu0 0.0
    %324 = vmatprep.subr.mxu0 0.0
    %325 = vmatpush1.xpose.msra.mxu0 0.0
    %326 = vmatprep.subr.mxu0 0.0
    %327 = vmatpush1.xpose.msra.mxu0 0.0
    %328 = vmatprep.subr.mxu0 0.0
    %329 = vmatpush1.xpose.msra.mxu0 0.0
    %330 = vmatprep.subr.mxu0 0.0
    %331 = vmatpush1.xpose.msra.mxu0 0.0
    %332 = vmatprep.subr.mxu0 0.0
    %333 = vmatpush1.xpose.msra.mxu0 0.0
    %334 = vmatprep.subr.mxu0 0.0
    %335 = vmatpush1.xpose.msra.mxu0 0.0
    %336 = vmatprep.subr.mxu0 0.0
    %337 = vmatpush1.xpose.msra.mxu0 0.0
    %338 = vmatprep.subr.mxu0 0.0
    %339 = vmatpush1.xpose.msra.mxu0 0.0
    %340 = vmatprep.subr.mxu0 0.0
    %341 = vmatpush1.xpose.msra.mxu0 0.0
    %342 = vmatprep.subr.mxu0 0.0
    %343 = vmatpush1.xpose.msra.mxu0 0.0
    %344 = vmatprep.subr.mxu0 0.0
    %345 = vmatpush1.xpose.msra.mxu0 0.0
    %346 = vmatprep.subr.mxu0 0.0
    %347 = vmatpush1.xpose.msra.mxu0 0.0
    %348 = vmatprep.subr.mxu0 0.0
    %349 = vmatpush1.xpose.msra.mxu0 0.0
    %350 = vmatprep.subr.mxu0 0.0
    %351 = vmatpush1.xpose.msra.mxu0 0.0
    %352 = vmatprep.subr.mxu0 0.0
    %353 = vmatpush1.xpose.msra.mxu0 0.0
    %354 = vmatprep.subr.mxu0 0.0
    %355 = vmatpush1.xpose.msra.mxu0 0.0
    %356 = vmatprep.subr.mxu0 0.0
    %357 = vmatpush1.xpose.msra.mxu0 0.0
    %358 = vmatprep.subr.mxu0 0.0
    %359 = vmatpush1.xpose.msra.mxu0 0.0
    %360 = vmatprep.subr.mxu0 0.0
    %361 = vmatpush1.xpose.msra.mxu0 0.0
    %362 = vmatprep.subr.mxu0 0.0
    %363 = vmatpush1.xpose.msra.mxu0 0.0
    %364 = vmatprep.subr.mxu0 0.0
    %365 = vmatpush1.xpose.msra.mxu0 0.0
    %366 = vmatprep.subr.mxu0 0.0
    %367 = vmatpush1.xpose.msra.mxu0 0.0
    %368 = vmatprep.subr.mxu0 0.0
    %369 = vmatpush1.xpose.msra.mxu0 0.0
    %370 = vmatprep.subr.mxu0 0.0
    %371 = vmatpush1.xpose.msra.mxu0 0.0
    %372 = vmatprep.subr.mxu0 0.0
    %373 = vmatpush1.xpose.msra.mxu0 0.0
    %374 = vmatprep.subr.mxu0 0.0
    %375 = vmatpush1.xpose.msra.mxu0 0.0
    %376 = vmatprep.subr.mxu0 0.0
    %377 = vmatpush1.xpose.msra.mxu0 0.0
    %378 = vmatprep.mubr.f32.mxu0 0.0
    %379 = vmatmul.mubr.f32.gmra.mrb[0].mxu0 %v310
    %v380 = vpop.f32.mrb[0].mxu0
    %v381 = vadd.f32 %v139, %v380
    %v382 = vpop.f32.mrb[0].mxu0
    %383 = vdwg.mxu0
    %v384 = vsel %vm218, %v381, -inf
    %385 = vmax.xlane.f32.xlu0 %v384
    %v386 = vpop.xlane.xlu0 %385
    %v387 = vsub.f32 %v381, %v386
    %v388 = vmul.f32 %v387, 1.442695
    %v389 = vpow.pop %v388
    %v390 = vsel %vm218, %v389, 0.0
    %391 = vadd.xlane.f32.xlu0 %v390
    %v392 = vpop.xlane.xlu0 %391
    %v393 = vrcp.pop %v392
    %v394 = vmul.f32 %v389, %v393
    %395 = vrot.lane.b32.xlu0 %v131, 48
    %v396 = vpop.permute.xlu0 %395
    %v399 = vsel %vm218, %v394, 0
    %401 = vmatprep.subr.mxu0 0.0
    %402 = vmatpush1.msra.mxu0 %v396
    %403 = vmatprep.subr.mxu0 0.0
    %404 = vmatpush1.msra.mxu0 0.0
    %405 = vmatprep.subr.mxu0 0.0
    %406 = vmatpush1.msra.mxu0 0.0
    %407 = vmatprep.subr.mxu0 0.0
    %408 = vmatpush1.msra.mxu0 0.0
    %409 = vmatprep.subr.mxu0 0.0
    %410 = vmatpush1.msra.mxu0 0.0
    %411 = vmatprep.subr.mxu0 0.0
    %412 = vmatpush1.msra.mxu0 0.0
    %413 = vmatprep.subr.mxu0 0.0
    %414 = vmatpush1.msra.mxu0 0.0
    %415 = vmatprep.subr.mxu0 0.0
    %416 = vmatpush1.msra.mxu0 0.0
    %417 = vmatprep.subr.mxu0 0.0
    %418 = vmatpush1.msra.mxu0 0.0
    %419 = vmatprep.subr.mxu0 0.0
    %420 = vmatpush1.msra.mxu0 0.0
    %421 = vmatprep.subr.mxu0 0.0
    %422 = vmatpush1.msra.mxu0 0.0
    %423 = vmatprep.subr.mxu0 0.0
    %424 = vmatpush1.msra.mxu0 0.0
    %425 = vmatprep.subr.mxu0 0.0
    %426 = vmatpush1.msra.mxu0 0.0
    %427 = vmatprep.subr.mxu0 0.0
    %428 = vmatpush1.msra.mxu0 0.0
    %429 = vmatprep.subr.mxu0 0.0
    %430 = vmatpush1.msra.mxu0 0.0
    %431 = vmatprep.subr.mxu0 0.0
    %432 = vmatpush1.msra.mxu0 0.0
    %433 = vmatprep.subr.mxu0 0.0
    %434 = vmatpush1.msra.mxu0 0.0
    %435 = vmatprep.subr.mxu0 0.0
    %436 = vmatpush1.msra.mxu0 0.0
    %437 = vmatprep.subr.mxu0 0.0
    %438 = vmatpush1.msra.mxu0 0.0
    %439 = vmatprep.subr.mxu0 0.0
    %440 = vmatpush1.msra.mxu0 0.0
    %441 = vmatprep.subr.mxu0 0.0
    %442 = vmatpush1.msra.mxu0 0.0
    %443 = vmatprep.subr.mxu0 0.0
    %444 = vmatpush1.msra.mxu0 0.0
    %445 = vmatprep.subr.mxu0 0.0
    %446 = vmatpush1.msra.mxu0 0.0
    %447 = vmatprep.subr.mxu0 0.0
    %448 = vmatpush1.msra.mxu0 0.0
    %449 = vmatprep.subr.mxu0 0.0
    %450 = vmatpush1.msra.mxu0 0.0
    %451 = vmatprep.subr.mxu0 0.0
    %452 = vmatpush1.msra.mxu0 0.0
    %453 = vmatprep.subr.mxu0 0.0
    %454 = vmatpush1.msra.mxu0 0.0
    %455 = vmatprep.subr.mxu0 0.0
    %456 = vmatpush1.msra.mxu0 0.0
    %457 = vmatprep.subr.mxu0 0.0
    %458 = vmatpush1.msra.mxu0 0.0
    %459 = vmatprep.subr.mxu0 0.0
    %460 = vmatpush1.msra.mxu0 0.0
    %461 = vmatprep.subr.mxu0 0.0
    %462 = vmatpush1.msra.mxu0 0.0
    %463 = vmatprep.subr.mxu0 0.0
    %464 = vmatpush1.msra.mxu0 0.0
    %465 = vmatprep.mubr.f32.mxu0 0.0
    %466 = vmatmul.mubr.f32.gmra.mrb[0].mxu0 %v399
    %v467 = vpop.f32.mrb[0].mxu0
    %v468 = vadd.f32 0.0, %v467
    %v469 = vpop.f32.mrb[0].mxu0
    %470 = vdwg.mxu0
    %472 = vrot.lane.b32.xlu0 %v468, 16
    %v473 = vpop.permute.xlu0 %472
    %v475 = vsel %vm143, %v303, %v473
    %v476 = vpack.c.bf16 %v475, %v475
    %v477 = vlaneseq
    %v478 = vshrl.u32 %v477, 7
    %v479 = vsub.s32 0, %v478
    %v480 = vrot.slane %v69, %v479
    %481 = vrot.lane.b32.xlu0 %v89, 32
    %v482 = vpop.permute.xlu0 %481
    %483 = vrot.lane.b32.xlu0 %v90, 32
    %v484 = vpop.permute.xlu0 %483
    %v488 = vsel %vm29, %v476, 0
    %490 = vmatprep.subr.bf16.mxu0 0
    %491 = vmatpush1.bf16.msra.mxu0 %v482
    %492 = vmatprep.subr.bf16.mxu0 0
    %493 = vmatpush1.bf16.msra.mxu0 %v484
    %494 = vmatprep.subr.bf16.mxu0 0
    %495 = vmatpush1.bf16.msra.mxu0 0
    %496 = vmatprep.subr.bf16.mxu0 0
    %497 = vmatpush1.bf16.msra.mxu0 0
    %498 = vmatprep.subr.bf16.mxu0 0
    %499 = vmatpush1.bf16.msra.mxu0 0
    %500 = vmatprep.subr.bf16.mxu0 0
    %501 = vmatpush1.bf16.msra.mxu0 0
    %502 = vmatprep.subr.bf16.mxu0 0
    %503 = vmatpush1.bf16.msra.mxu0 0
    %504 = vmatprep.subr.bf16.mxu0 0
    %505 = vmatpush1.bf16.msra.mxu0 0
    %506 = vmatprep.subr.bf16.mxu0 0
    %507 = vmatpush1.bf16.msra.mxu0 0
    %508 = vmatprep.subr.bf16.mxu0 0
    %509 = vmatpush1.bf16.msra.mxu0 0
    %510 = vmatprep.subr.bf16.mxu0 0
    %511 = vmatpush1.bf16.msra.mxu0 0
    %512 = vmatprep.subr.bf16.mxu0 0
    %513 = vmatpush1.bf16.msra.mxu0 0
    %514 = vmatprep.subr.bf16.mxu0 0
    %515 = vmatpush1.bf16.msra.mxu0 0
    %516 = vmatprep.subr.bf16.mxu0 0
    %517 = vmatpush1.bf16.msra.mxu0 0
    %518 = vmatprep.subr.bf16.mxu0 0
    %519 = vmatpush1.bf16.msra.mxu0 0
    %520 = vmatprep.subr.bf16.mxu0 0
    %521 = vmatpush1.bf16.msra.mxu0 0
    %522 = vmatprep.mubr.bf16.mxu0 0
    %523 = vmatmul.mubr.bf16.gmra.mrb[0].mxu0 %v488
    %v524 = vpop.f32.mrb[0].mxu0
    %v525 = vadd.f32 %v480, %v524
    %v526 = vpop.f32.mrb[0].mxu0
    %v527 = vpop.f32.mrb[0].mxu0
    %v528 = vpop.f32.mrb[0].mxu0
    %529 = vdwg.mxu0
    %v530 = vadd.f32 %v525, %v55
    %v531 = vsel %vm29, %v530, 0.0
    %532 = vadd.xlane.f32.xlu0 %v531
    %v533 = vpop.xlane.xlu0 %532
    %v534 = vmul.f32 %v533, %v33
    %v535 = vmul.f32 %v530, %v530
    %v536 = vsel %vm29, %v535, 0.0
    %537 = vadd.xlane.f32.xlu0 %v536
    %v538 = vpop.xlane.xlu0 %537
    %v539 = vmul.f32 %v538, %v33
    %v540 = vmul.f32 %v534, %v534
    %v541 = vsub.f32 %v539, %v540
    %v542 = vsub.f32 %v530, %v534
    %v543 = vadd.f32 %v541, 1e-05
    %v544 = vrsqrt.pop %v543
    %v545 = vmul.f32 %v542, %v544
    %v546 = vlaneseq
    %v547 = vshrl.u32 %v546, 7
    %v548 = vsub.s32 0, %v547
    %v549 = vrot.slane %v70, %v548
    %v550 = vmul.f32 %v545, %v549
    %v551 = vlaneseq
    %v552 = vshrl.u32 %v551, 7
    %v553 = vsub.s32 0, %v552
    %v554 = vrot.slane %v71, %v553
    %v555 = vadd.f32 %v550, %v554
    %v556 = vpack.c.bf16 %v555, %v555
    %v557 = vlaneseq
    %v558 = vshrl.u32 %v557, 7
    %v559 = vsub.s32 0, %v558
    %v560 = vrot.slane %v72, %v559
    %v561 = vunpack.c.h.b16 %v56
    %v562 = vunpack.c.h.b16 %v57
    %v563 = vunpack.c.h.b16 %v58
    %v564 = vunpack.c.h.b16 %v59
    %v565 = vpack.c.b16 %v562, %v561
    %v566 = vpack.c.b16 %v564, %v563
    %v570 = vsel %vm29, %v556, 0
    %572 = vmatprep.subr.bf16.mxu0 0
    %573 = vmatpush1.bf16.msra.mxu0 %v565
    %574 = vmatprep.subr.bf16.mxu0 0
    %575 = vmatpush1.bf16.msra.mxu0 %v566
    %576 = vmatprep.subr.bf16.mxu0 0
    %577 = vmatpush1.bf16.msra.mxu0 0
    %578 = vmatprep.subr.bf16.mxu0 0
    %579 = vmatpush1.bf16.msra.mxu0 0
    %580 = vmatprep.subr.bf16.mxu0 0
    %581 = vmatpush1.bf16.msra.mxu0 0
    %582 = vmatprep.subr.bf16.mxu0 0
    %583 = vmatpush1.bf16.msra.mxu0 0
    %584 = vmatprep.subr.bf16.mxu0 0
    %585 = vmatpush1.bf16.msra.mxu0 0
    %586 = vmatprep.subr.bf16.mxu0 0
    %587 = vmatpush1.bf16.msra.mxu0 0
    %588 = vmatprep.subr.bf16.mxu0 0
    %589 = vmatpush1.bf16.msra.mxu0 0
    %590 = vmatprep.subr.bf16.mxu0 0
    %591 = vmatpush1.bf16.msra.mxu0 0
    %592 = vmatprep.subr.bf16.mxu0 0
    %593 = vmatpush1.bf16.msra.mxu0 0
    %594 = vmatprep.subr.bf16.mxu0 0
    %595 = vmatpush1.bf16.msra.mxu0 0
    %596 = vmatprep.subr.bf16.mxu0 0
    %597 = vmatpush1.bf16.msra.mxu0 0
    %598 = vmatprep.subr.bf16.mxu0 0
    %599 = vmatpush1.bf16.msra.mxu0 0
    %600 = vmatprep.subr.bf16.mxu0 0
    %601 = vmatpush1.bf16.msra.mxu0 0
    %602 = vmatprep.subr.bf16.mxu0 0
    %603 = vmatpush1.bf16.msra.mxu0 0
    %604 = vmatprep.mubr.bf16.mxu0 0
    %605 = vmatmul.mubr.bf16.gmra.mrb[0].mxu0 %v570
    %v606 = vpop.f32.mrb[0].mxu0
    %v607 = vadd.f32 %v560, %v606
    %v608 = vpop.f32.mrb[0].mxu0
    %v609 = vpop.f32.mrb[0].mxu0
    %v610 = vpop.f32.mrb[0].mxu0
    %611 = vdwg.mxu0
    %v612 = vmul.f32 %v607, %v607
    %v613 = vmul.f32 %v607, %v612
    %v614 = vmul.f32 %v613, 0.044715
    %v615 = vadd.f32 %v607, %v614
    %v616 = vmul.f32 %v615, 0.7978846
    %v617 = vtanh.pop %v616
    %v618 = vadd.f32 %v617, 1.0
    %v619 = vmul.f32 %v618, 0.5
    %v620 = vmul.f32 %v607, %v619
    %v621 = vpack.c.bf16 %v620, %v620
    %v622 = vlaneseq
    %v623 = vshrl.u32 %v622, 7
    %v624 = vsub.s32 0, %v623
    %v625 = vrot.slane %v73, %v624
    %v634 = vunpack.c.l.b16 %v60
    %v635 = vunpack.c.l.b16 %v61
    %v636 = vunpack.c.l.b16 %v62
    %v637 = vunpack.c.l.b16 %v63
    %v638 = vunpack.c.l.b16 %v64
    %v639 = vunpack.c.l.b16 %v65
    %v640 = vunpack.c.l.b16 %v66
    %v641 = vunpack.c.l.b16 %v67
    %v642 = vpack.c.b16 %v635, %v634
    %v643 = vpack.c.b16 %v637, %v636
    %v644 = vpack.c.b16 %v639, %v638
    %v645 = vpack.c.b16 %v641, %v640
    %vm650 = vcmask 523264
    %v652 = vsel %vm650, %v621, 0
    %654 = vmatprep.subr.bf16.mxu0 0
    %655 = vmatpush1.bf16.msra.mxu0 %v642
    %656 = vmatprep.subr.bf16.mxu0 0
    %657 = vmatpush1.bf16.msra.mxu0 %v643
    %658 = vmatprep.subr.bf16.mxu0 0
    %659 = vmatpush1.bf16.msra.mxu0 %v644
    %660 = vmatprep.subr.bf16.mxu0 0
    %661 = vmatpush1.bf16.msra.mxu0 %v645
    %662 = vmatprep.subr.bf16.mxu0 0
    %663 = vmatpush1.bf16.msra.mxu0 0
    %664 = vmatprep.subr.bf16.mxu0 0
    %665 = vmatpush1.bf16.msra.mxu0 0
    %666 = vmatprep.subr.bf16.mxu0 0
    %667 = vmatpush1.bf16.msra.mxu0 0
    %668 = vmatprep.subr.bf16.mxu0 0
    %669 = vmatpush1.bf16.msra.mxu0 0
    %670 = vmatprep.subr.bf16.mxu0 0
    %671 = vmatpush1.bf16.msra.mxu0 0
    %672 = vmatprep.subr.bf16.mxu0 0
    %673 = vmatpush1.bf16.msra.mxu0 0
    %674 = vmatprep.subr.bf16.mxu0 0
    %675 = vmatpush1.bf16.msra.mxu0 0
    %676 = vmatprep.subr.bf16.mxu0 0
    %677 = vmatpush1.bf16.msra.mxu0 0
    %678 = vmatprep.subr.bf16.mxu0 0
    %679 = vmatpush1.bf16.msra.mxu0 0
    %680 = vmatprep.subr.bf16.mxu0 0
    %681 = vmatpush1.bf16.msra.mxu0 0
    %682 = vmatprep.subr.bf16.mxu0 0
    %683 = vmatpush1.bf16.msra.mxu0 0
    %684 = vmatprep.subr.bf16.mxu0 0
    %685 = vmatpush1.bf16.msra.mxu0 0
    %686 = vmatprep.mubr.bf16.mxu0 0
    %687 = vmatmul.mubr.bf16.gmra.mrb[0].mxu0 %v652
    %v688 = vpop.f32.mrb[0].mxu0
    %v689 = vadd.f32 %v625, %v688
    %v690 = vpop.f32.mrb[0].mxu0
    %v691 = vpop.f32.mrb[0].mxu0
    %v692 = vpop.f32.mrb[0].mxu0
    %693 = vdwg.mxu0
    %v694 = vadd.f32 %v689, %v555
    %v695 = vsel %vm29, %v694, 0.0
    %696 = vadd.xlane.f32.xlu0 %v695
    %v697 = vpop.xlane.xlu0 %696
    %v698 = vmul.f32 %v697, %v33
    %v699 = vmul.f32 %v694, %v694
    %v700 = vsel %vm29, %v699, 0.0
    %701 = vadd.xlane.f32.xlu0 %v700
    %v702 = vpop.xlane.xlu0 %701
    %v703 = vmul.f32 %v702, %v33
    %v704 = vmul.f32 %v698, %v698
    %v705 = vsub.f32 %v703, %v704
    %v706 = vsub.f32 %v694, %v698
    %v707 = vadd.f32 %v705, 1e-05
    %v708 = vrsqrt.pop %v707
    %v709 = vmul.f32 %v706, %v708
    %v710 = vlaneseq
    %v711 = vshrl.u32 %v710, 7
    %v712 = vsub.s32 0, %v711
    %v713 = vrot.slane %v74, %v712
    %v714 = vmul.f32 %v709, %v713
    %v715 = vlaneseq
    %v716 = vshrl.u32 %v715, 7
    %v717 = vsub.s32 0, %v716
    %v718 = vrot.slane %v75, %v717
    %v719 = vadd.f32 %v714, %v718
    %s720 = scalar_lea.vmem %s1, 32
    %v721 = vld [vmem:[%s720] sm:$0xff]
    %v722 = vld [vmem:[%s720 + $0x8] sm:$0xff]
    %v723 = vld [vmem:[%s720 + $0x10] sm:$0xff]
    %v724 = vld [vmem:[%s720 + $0x18] sm:$0xff]
    %s725 = scalar_lea.vmem %s2, 32
    %v726 = vld [vmem:[%s725] sm:$0xf]
    %v727 = vld [vmem:[%s725 + $0x4] sm:$0xf]
    %v728 = vld [vmem:[%s725 + $0x8] sm:$0xf]
    %v729 = vld [vmem:[%s725 + $0xc] sm:$0xf]
    %v730 = vld [vmem:[%s725 + $0x10] sm:$0xf]
    %v731 = vld [vmem:[%s725 + $0x14] sm:$0xf]
    %v732 = vld [vmem:[%s725 + $0x18] sm:$0xf]
    %v733 = vld [vmem:[%s725 + $0x1c] sm:$0xf]
    %v734 = vld [vmem:[%s3 + $0x12] sm:$0x1]
    %v735 = vld [vmem:[%s3 + $0x13] sm:$0x1]
    %v736 = vld [vmem:[%s3 + $0x14] sm:$0x1]
    %v737 = vld [vmem:[%s3 + $0x15] sm:$0x1]
    %v738 = vld [vmem:[%s3 + $0x16] sm:$0x1]
    %v739 = vld [vmem:[%s3 + $0x17] sm:$0x1]
    %v740 = vld [vmem:[%s3 + $0x18] sm:$0x1]
    %v741 = vld [vmem:[%s3 + $0x19] sm:$0x1]
    %v742 = vpack.c.bf16 %v719, %v719
    %v743 = vlaneseq
    %v744 = vshrl.u32 %v743, 7
    %v745 = vsub.s32 0, %v744
    %v746 = vrot.slane %v734, %v745
    %v751 = vunpack.c.l.b16 %v721
    %v752 = vunpack.c.l.b16 %v722
    %v753 = vunpack.c.l.b16 %v723
    %v754 = vunpack.c.l.b16 %v724
    %v755 = vpack.c.b16 %v752, %v751
    %v756 = vpack.c.b16 %v754, %v753
    %v760 = vsel %vm29, %v742, 0
    %762 = vmatprep.subr.bf16.mxu0 0
    %763 = vmatpush1.bf16.msra.mxu0 %v755
    %764 = vmatprep.subr.bf16.mxu0 0
    %765 = vmatpush1.bf16.msra.mxu0 %v756
    %766 = vmatprep.subr.bf16.mxu0 0
    %767 = vmatpush1.bf16.msra.mxu0 0
    %768 = vmatprep.subr.bf16.mxu0 0
    %769 = vmatpush1.bf16.msra.mxu0 0
    %770 = vmatprep.subr.bf16.mxu0 0
    %771 = vmatpush1.bf16.msra.mxu0 0
    %772 = vmatprep.subr.bf16.mxu0 0
    %773 = vmatpush1.bf16.msra.mxu0 0
    %774 = vmatprep.subr.bf16.mxu0 0
    %775 = vmatpush1.bf16.msra.mxu0 0
    %776 = vmatprep.subr.bf16.mxu0 0
    %777 = vmatpush1.bf16.msra.mxu0 0
    %778 = vmatprep.subr.bf16.mxu0 0
    %779 = vmatpush1.bf16.msra.mxu0 0
    %780 = vmatprep.subr.bf16.mxu0 0
    %781 = vmatpush1.bf16.msra.mxu0 0
    %782 = vmatprep.subr.bf16.mxu0 0
    %783 = vmatpush1.bf16.msra.mxu0 0
    %784 = vmatprep.subr.bf16.mxu0 0
    %785 = vmatpush1.bf16.msra.mxu0 0
    %786 = vmatprep.subr.bf16.mxu0 0
    %787 = vmatpush1.bf16.msra.mxu0 0
    %788 = vmatprep.subr.bf16.mxu0 0
    %789 = vmatpush1.bf16.msra.mxu0 0
    %790 = vmatprep.subr.bf16.mxu0 0
    %791 = vmatpush1.bf16.msra.mxu0 0
    %792 = vmatprep.subr.bf16.mxu0 0
    %793 = vmatpush1.bf16.msra.mxu0 0
    %794 = vmatprep.mubr.bf16.mxu0 0
    %795 = vmatmul.mubr.bf16.gmra.mrb[0].mxu0 %v760
    %v796 = vpop.f32.mrb[0].mxu0
    %v797 = vadd.f32 %v746, %v796
    %v798 = vpop.f32.mrb[0].mxu0
    %v799 = vpop.f32.mrb[0].mxu0
    %v800 = vpop.f32.mrb[0].mxu0
    %801 = vdwg.mxu0
    %803 = vrot.lane.b32.xlu0 %v797, 96
    %v804 = vpop.permute.xlu0 %803
    %v805 = vsel %vm143, %v797, 0
    %v807 = vsel %vm143, %v804, 0
    %809 = vmatprep.subr.mxu0 0.0
    %810 = vmatpush1.xpose.msra.mxu0 %v807
    %811 = vmatprep.subr.mxu0 0.0
    %812 = vmatpush1.xpose.msra.mxu0 0.0
    %813 = vmatprep.subr.mxu0 0.0
    %814 = vmatpush1.xpose.msra.mxu0 0.0
    %815 = vmatprep.subr.mxu0 0.0
    %816 = vmatpush1.xpose.msra.mxu0 0.0
    %817 = vmatprep.subr.mxu0 0.0
    %818 = vmatpush1.xpose.msra.mxu0 0.0
    %819 = vmatprep.subr.mxu0 0.0
    %820 = vmatpush1.xpose.msra.mxu0 0.0
    %821 = vmatprep.subr.mxu0 0.0
    %822 = vmatpush1.xpose.msra.mxu0 0.0
    %823 = vmatprep.subr.mxu0 0.0
    %824 = vmatpush1.xpose.msra.mxu0 0.0
    %825 = vmatprep.subr.mxu0 0.0
    %826 = vmatpush1.xpose.msra.mxu0 0.0
    %827 = vmatprep.subr.mxu0 0.0
    %828 = vmatpush1.xpose.msra.mxu0 0.0
    %829 = vmatprep.subr.mxu0 0.0
    %830 = vmatpush1.xpose.msra.mxu0 0.0
    %831 = vmatprep.subr.mxu0 0.0
    %832 = vmatpush1.xpose.msra.mxu0 0.0
    %833 = vmatprep.subr.mxu0 0.0
    %834 = vmatpush1.xpose.msra.mxu0 0.0
    %835 = vmatprep.subr.mxu0 0.0
    %836 = vmatpush1.xpose.msra.mxu0 0.0
    %837 = vmatprep.subr.mxu0 0.0
    %838 = vmatpush1.xpose.msra.mxu0 0.0
    %839 = vmatprep.subr.mxu0 0.0
    %840 = vmatpush1.xpose.msra.mxu0 0.0
    %841 = vmatprep.subr.mxu0 0.0
    %842 = vmatpush1.xpose.msra.mxu0 0.0
    %843 = vmatprep.subr.mxu0 0.0
    %844 = vmatpush1.xpose.msra.mxu0 0.0
    %845 = vmatprep.subr.mxu0 0.0
    %846 = vmatpush1.xpose.msra.mxu0 0.0
    %847 = vmatprep.subr.mxu0 0.0
    %848 = vmatpush1.xpose.msra.mxu0 0.0
    %849 = vmatprep.subr.mxu0 0.0
    %850 = vmatpush1.xpose.msra.mxu0 0.0
    %851 = vmatprep.subr.mxu0 0.0
    %852 = vmatpush1.xpose.msra.mxu0 0.0
    %853 = vmatprep.subr.mxu0 0.0
    %854 = vmatpush1.xpose.msra.mxu0 0.0
    %855 = vmatprep.subr.mxu0 0.0
    %856 = vmatpush1.xpose.msra.mxu0 0.0
    %857 = vmatprep.subr.mxu0 0.0
    %858 = vmatpush1.xpose.msra.mxu0 0.0
    %859 = vmatprep.subr.mxu0 0.0
    %860 = vmatpush1.xpose.msra.mxu0 0.0
    %861 = vmatprep.subr.mxu0 0.0
    %862 = vmatpush1.xpose.msra.mxu0 0.0
    %863 = vmatprep.subr.mxu0 0.0
    %864 = vmatpush1.xpose.msra.mxu0 0.0
    %865 = vmatprep.subr.mxu0 0.0
    %866 = vmatpush1.xpose.msra.mxu0 0.0
    %867 = vmatprep.subr.mxu0 0.0
    %868 = vmatpush1.xpose.msra.mxu0 0.0
    %869 = vmatprep.subr.mxu0 0.0
    %870 = vmatpush1.xpose.msra.mxu0 0.0
    %871 = vmatprep.subr.mxu0 0.0
    %872 = vmatpush1.xpose.msra.mxu0 0.0
    %873 = vmatprep.mubr.f32.mxu0 0.0
    %874 = vmatmul.mubr.f32.gmra.mrb[0].mxu0 %v805
    %v875 = vpop.f32.mrb[0].mxu0
    %v876 = vadd.f32 %v139, %v875
    %v877 = vpop.f32.mrb[0].mxu0
    %878 = vdwg.mxu0
    %v879 = vsel %vm218, %v876, -inf
    %880 = vmax.xlane.f32.xlu0 %v879
    %v881 = vpop.xlane.xlu0 %880
    %v882 = vsub.f32 %v876, %v881
    %v883 = vmul.f32 %v882, 1.442695
    %v884 = vpow.pop %v883
    %v885 = vsel %vm218, %v884, 0.0
    %886 = vadd.xlane.f32.xlu0 %v885
    %v887 = vpop.xlane.xlu0 %886
    %v888 = vrcp.pop %v887
    %v889 = vmul.f32 %v884, %v888
    %890 = vrot.lane.b32.xlu0 %v797, 64
    %v891 = vpop.permute.xlu0 %890
    %v894 = vsel %vm218, %v889, 0
    %896 = vmatprep.subr.mxu0 0.0
    %897 = vmatpush1.msra.mxu0 %v891
    %898 = vmatprep.subr.mxu0 0.0
    %899 = vmatpush1.msra.mxu0 0.0
    %900 = vmatprep.subr.mxu0 0.0
    %901 = vmatpush1.msra.mxu0 0.0
    %902 = vmatprep.subr.mxu0 0.0
    %903 = vmatpush1.msra.mxu0 0.0
    %904 = vmatprep.subr.mxu0 0.0
    %905 = vmatpush1.msra.mxu0 0.0
    %906 = vmatprep.subr.mxu0 0.0
    %907 = vmatpush1.msra.mxu0 0.0
    %908 = vmatprep.subr.mxu0 0.0
    %909 = vmatpush1.msra.mxu0 0.0
    %910 = vmatprep.subr.mxu0 0.0
    %911 = vmatpush1.msra.mxu0 0.0
    %912 = vmatprep.subr.mxu0 0.0
    %913 = vmatpush1.msra.mxu0 0.0
    %914 = vmatprep.subr.mxu0 0.0
    %915 = vmatpush1.msra.mxu0 0.0
    %916 = vmatprep.subr.mxu0 0.0
    %917 = vmatpush1.msra.mxu0 0.0
    %918 = vmatprep.subr.mxu0 0.0
    %919 = vmatpush1.msra.mxu0 0.0
    %920 = vmatprep.subr.mxu0 0.0
    %921 = vmatpush1.msra.mxu0 0.0
    %922 = vmatprep.subr.mxu0 0.0
    %923 = vmatpush1.msra.mxu0 0.0
    %924 = vmatprep.subr.mxu0 0.0
    %925 = vmatpush1.msra.mxu0 0.0
    %926 = vmatprep.subr.mxu0 0.0
    %927 = vmatpush1.msra.mxu0 0.0
    %928 = vmatprep.subr.mxu0 0.0
    %929 = vmatpush1.msra.mxu0 0.0
    %930 = vmatprep.subr.mxu0 0.0
    %931 = vmatpush1.msra.mxu0 0.0
    %932 = vmatprep.subr.mxu0 0.0
    %933 = vmatpush1.msra.mxu0 0.0
    %934 = vmatprep.subr.mxu0 0.0
    %935 = vmatpush1.msra.mxu0 0.0
    %936 = vmatprep.subr.mxu0 0.0
    %937 = vmatpush1.msra.mxu0 0.0
    %938 = vmatprep.subr.mxu0 0.0
    %939 = vmatpush1.msra.mxu0 0.0
    %940 = vmatprep.subr.mxu0 0.0
    %941 = vmatpush1.msra.mxu0 0.0
    %942 = vmatprep.subr.mxu0 0.0
    %943 = vmatpush1.msra.mxu0 0.0
    %944 = vmatprep.subr.mxu0 0.0
    %945 = vmatpush1.msra.mxu0 0.0
    %946 = vmatprep.subr.mxu0 0.0
    %947 = vmatpush1.msra.mxu0 0.0
    %948 = vmatprep.subr.mxu0 0.0
    %949 = vmatpush1.msra.mxu0 0.0
    %950 = vmatprep.subr.mxu0 0.0
    %951 = vmatpush1.msra.mxu0 0.0
    %952 = vmatprep.subr.mxu0 0.0
    %953 = vmatpush1.msra.mxu0 0.0
    %954 = vmatprep.subr.mxu0 0.0
    %955 = vmatpush1.msra.mxu0 0.0
    %956 = vmatprep.subr.mxu0 0.0
    %957 = vmatpush1.msra.mxu0 0.0
    %958 = vmatprep.subr.mxu0 0.0
    %959 = vmatpush1.msra.mxu0 0.0
    %960 = vmatprep.mubr.f32.mxu0 0.0
    %961 = vmatmul.mubr.f32.gmra.mrb[0].mxu0 %v894
    %v962 = vpop.f32.mrb[0].mxu0
    %v963 = vadd.f32 0.0, %v962
    %v964 = vpop.f32.mrb[0].mxu0
    %965 = vdwg.mxu0
    %966 = vrot.lane.b32.xlu0 %v797, 112
    %v967 = vpop.permute.xlu0 %966
    %968 = vrot.lane.b32.xlu0 %v797, 80
    %v969 = vpop.permute.xlu0 %968
    %v970 = vsel %vm143, %v967, 0
    %v972 = vsel %vm143, %v969, 0
    %974 = vmatprep.subr.mxu0 0.0
    %975 = vmatpush1.xpose.msra.mxu0 %v972
    %976 = vmatprep.subr.mxu0 0.0
    %977 = vmatpush1.xpose.msra.mxu0 0.0
    %978 = vmatprep.subr.mxu0 0.0
    %979 = vmatpush1.xpose.msra.mxu0 0.0
    %980 = vmatprep.subr.mxu0 0.0
    %981 = vmatpush1.xpose.msra.mxu0 0.0
    %982 = vmatprep.subr.mxu0 0.0
    %983 = vmatpush1.xpose.msra.mxu0 0.0
    %984 = vmatprep.subr.mxu0 0.0
    %985 = vmatpush1.xpose.msra.mxu0 0.0
    %986 = vmatprep.subr.mxu0 0.0
    %987 = vmatpush1.xpose.msra.mxu0 0.0
    %988 = vmatprep.subr.mxu0 0.0
    %989 = vmatpush1.xpose.msra.mxu0 0.0
    %990 = vmatprep.subr.mxu0 0.0
    %991 = vmatpush1.xpose.msra.mxu0 0.0
    %992 = vmatprep.subr.mxu0 0.0
    %993 = vmatpush1.xpose.msra.mxu0 0.0
    %994 = vmatprep.subr.mxu0 0.0
    %995 = vmatpush1.xpose.msra.mxu0 0.0
    %996 = vmatprep.subr.mxu0 0.0
    %997 = vmatpush1.xpose.msra.mxu0 0.0
    %998 = vmatprep.subr.mxu0 0.0
    %999 = vmatpush1.xpose.msra.mxu0 0.0
    %1000 = vmatprep.subr.mxu0 0.0
    %1001 = vmatpush1.xpose.msra.mxu0 0.0
    %1002 = vmatprep.subr.mxu0 0.0
    %1003 = vmatpush1.xpose.msra.mxu0 0.0
    %1004 = vmatprep.subr.mxu0 0.0
    %1005 = vmatpush1.xpose.msra.mxu0 0.0
    %1006 = vmatprep.subr.mxu0 0.0
    %1007 = vmatpush1.xpose.msra.mxu0 0.0
    %1008 = vmatprep.subr.mxu0 0.0
    %1009 = vmatpush1.xpose.msra.mxu0 0.0
    %1010 = vmatprep.subr.mxu0 0.0
    %1011 = vmatpush1.xpose.msra.mxu0 0.0
    %1012 = vmatprep.subr.mxu0 0.0
    %1013 = vmatpush1.xpose.msra.mxu0 0.0
    %1014 = vmatprep.subr.mxu0 0.0
    %1015 = vmatpush1.xpose.msra.mxu0 0.0
    %1016 = vmatprep.subr.mxu0 0.0
    %1017 = vmatpush1.xpose.msra.mxu0 0.0
    %1018 = vmatprep.subr.mxu0 0.0
    %1019 = vmatpush1.xpose.msra.mxu0 0.0
    %1020 = vmatprep.subr.mxu0 0.0
    %1021 = vmatpush1.xpose.msra.mxu0 0.0
    %1022 = vmatprep.subr.mxu0 0.0
    %1023 = vmatpush1.xpose.msra.mxu0 0.0
    %1024 = vmatprep.subr.mxu0 0.0
    %1025 = vmatpush1.xpose.msra.mxu0 0.0
    %1026 = vmatprep.subr.mxu0 0.0
    %1027 = vmatpush1.xpose.msra.mxu0 0.0
    %1028 = vmatprep.subr.mxu0 0.0
    %1029 = vmatpush1.xpose.msra.mxu0 0.0
    %1030 = vmatprep.subr.mxu0 0.0
    %1031 = vmatpush1.xpose.msra.mxu0 0.0
    %1032 = vmatprep.subr.mxu0 0.0
    %1033 = vmatpush1.xpose.msra.mxu0 0.0
    %1034 = vmatprep.subr.mxu0 0.0
    %1035 = vmatpush1.xpose.msra.mxu0 0.0
    %1036 = vmatprep.subr.mxu0 0.0
    %1037 = vmatpush1.xpose.msra.mxu0 0.0
    %1038 = vmatprep.mubr.f32.mxu0 0.0
    %1039 = vmatmul.mubr.f32.gmra.mrb[0].mxu0 %v970
    %v1040 = vpop.f32.mrb[0].mxu0
    %v1041 = vadd.f32 %v139, %v1040
    %v1042 = vpop.f32.mrb[0].mxu0
    %1043 = vdwg.mxu0
    %v1044 = vsel %vm218, %v1041, -inf
    %1045 = vmax.xlane.f32.xlu0 %v1044
    %v1046 = vpop.xlane.xlu0 %1045
    %v1047 = vsub.f32 %v1041, %v1046
    %v1048 = vmul.f32 %v1047, 1.442695
    %v1049 = vpow.pop %v1048
    %v1050 = vsel %vm218, %v1049, 0.0
    %1051 = vadd.xlane.f32.xlu0 %v1050
    %v1052 = vpop.xlane.xlu0 %1051
    %v1053 = vrcp.pop %v1052
    %v1054 = vmul.f32 %v1049, %v1053
    %1055 = vrot.lane.b32.xlu0 %v797, 48
    %v1056 = vpop.permute.xlu0 %1055
    %v1059 = vsel %vm218, %v1054, 0
    %1061 = vmatprep.subr.mxu0 0.0
    %1062 = vmatpush1.msra.mxu0 %v1056
    %1063 = vmatprep.subr.mxu0 0.0
    %1064 = vmatpush1.msra.mxu0 0.0
    %1065 = vmatprep.subr.mxu0 0.0
    %1066 = vmatpush1.msra.mxu0 0.0
    %1067 = vmatprep.subr.mxu0 0.0
    %1068 = vmatpush1.msra.mxu0 0.0
    %1069 = vmatprep.subr.mxu0 0.0
    %1070 = vmatpush1.msra.mxu0 0.0
    %1071 = vmatprep.subr.mxu0 0.0
    %1072 = vmatpush1.msra.mxu0 0.0
    %1073 = vmatprep.subr.mxu0 0.0
    %1074 = vmatpush1.msra.mxu0 0.0
    %1075 = vmatprep.subr.mxu0 0.0
    %1076 = vmatpush1.msra.mxu0 0.0
    %1077 = vmatprep.subr.mxu0 0.0
    %1078 = vmatpush1.msra.mxu0 0.0
    %1079 = vmatprep.subr.mxu0 0.0
    %1080 = vmatpush1.msra.mxu0 0.0
    %1081 = vmatprep.subr.mxu0 0.0
    %1082 = vmatpush1.msra.mxu0 0.0
    %1083 = vmatprep.subr.mxu0 0.0
    %1084 = vmatpush1.msra.mxu0 0.0
    %1085 = vmatprep.subr.mxu0 0.0
    %1086 = vmatpush1.msra.mxu0 0.0
    %1087 = vmatprep.subr.mxu0 0.0
    %1088 = vmatpush1.msra.mxu0 0.0
    %1089 = vmatprep.subr.mxu0 0.0
    %1090 = vmatpush1.msra.mxu0 0.0
    %1091 = vmatprep.subr.mxu0 0.0
    %1092 = vmatpush1.msra.mxu0 0.0
    %1093 = vmatprep.subr.mxu0 0.0
    %1094 = vmatpush1.msra.mxu0 0.0
    %1095 = vmatprep.subr.mxu0 0.0
    %1096 = vmatpush1.msra.mxu0 0.0
    %1097 = vmatprep.subr.mxu0 0.0
    %1098 = vmatpush1.msra.mxu0 0.0
    %1099 = vmatprep.subr.mxu0 0.0
    %1100 = vmatpush1.msra.mxu0 0.0
    %1101 = vmatprep.subr.mxu0 0.0
    %1102 = vmatpush1.msra.mxu0 0.0
    %1103 = vmatprep.subr.mxu0 0.0
    %1104 = vmatpush1.msra.mxu0 0.0
    %1105 = vmatprep.subr.mxu0 0.0
    %1106 = vmatpush1.msra.mxu0 0.0
    %1107 = vmatprep.subr.mxu0 0.0
    %1108 = vmatpush1.msra.mxu0 0.0
    %1109 = vmatprep.subr.mxu0 0.0
    %1110 = vmatpush1.msra.mxu0 0.0
    %1111 = vmatprep.subr.mxu0 0.0
    %1112 = vmatpush1.msra.mxu0 0.0
    %1113 = vmatprep.subr.mxu0 0.0
    %1114 = vmatpush1.msra.mxu0 0.0
    %1115 = vmatprep.subr.mxu0 0.0
    %1116 = vmatpush1.msra.mxu0 0.0
    %1117 = vmatprep.subr.mxu0 0.0
    %1118 = vmatpush1.msra.mxu0 0.0
    %1119 = vmatprep.subr.mxu0 0.0
    %1120 = vmatpush1.msra.mxu0 0.0
    %1121 = vmatprep.subr.mxu0 0.0
    %1122 = vmatpush1.msra.mxu0 0.0
    %1123 = vmatprep.subr.mxu0 0.0
    %1124 = vmatpush1.msra.mxu0 0.0
    %1125 = vmatprep.mubr.f32.mxu0 0.0
    %1126 = vmatmul.mubr.f32.gmra.mrb[0].mxu0 %v1059
    %v1127 = vpop.f32.mrb[0].mxu0
    %v1128 = vadd.f32 0.0, %v1127
    %v1129 = vpop.f32.mrb[0].mxu0
    %1130 = vdwg.mxu0
    %1132 = vrot.lane.b32.xlu0 %v1128, 16
    %v1133 = vpop.permute.xlu0 %1132
    %v1135 = vsel %vm143, %v963, %v1133
    %v1136 = vpack.c.bf16 %v1135, %v1135
    %v1137 = vlaneseq
    %v1138 = vshrl.u32 %v1137, 7
    %v1139 = vsub.s32 0, %v1138
    %v1140 = vrot.slane %v735, %v1139
    %1141 = vrot.lane.b32.xlu0 %v755, 32
    %v1142 = vpop.permute.xlu0 %1141
    %1143 = vrot.lane.b32.xlu0 %v756, 32
    %v1144 = vpop.permute.xlu0 %1143
    %v1148 = vsel %vm29, %v1136, 0
    %1150 = vmatprep.subr.bf16.mxu0 0
    %1151 = vmatpush1.bf16.msra.mxu0 %v1142
    %1152 = vmatprep.subr.bf16.mxu0 0
    %1153 = vmatpush1.bf16.msra.mxu0 %v1144
    %1154 = vmatprep.subr.bf16.mxu0 0
    %1155 = vmatpush1.bf16.msra.mxu0 0
    %1156 = vmatprep.subr.bf16.mxu0 0
    %1157 = vmatpush1.bf16.msra.mxu0 0
    %1158 = vmatprep.subr.bf16.mxu0 0
    %1159 = vmatpush1.bf16.msra.mxu0 0
    %1160 = vmatprep.subr.bf16.mxu0 0
    %1161 = vmatpush1.bf16.msra.mxu0 0
    %1162 = vmatprep.subr.bf16.mxu0 0
    %1163 = vmatpush1.bf16.msra.mxu0 0
    %1164 = vmatprep.subr.bf16.mxu0 0
    %1165 = vmatpush1.bf16.msra.mxu0 0
    %1166 = vmatprep.subr.bf16.mxu0 0
    %1167 = vmatpush1.bf16.msra.mxu0 0
    %1168 = vmatprep.subr.bf16.mxu0 0
    %1169 = vmatpush1.bf16.msra.mxu0 0
    %1170 = vmatprep.subr.bf16.mxu0 0
    %1171 = vmatpush1.bf16.msra.mxu0 0
    %1172 = vmatprep.subr.bf16.mxu0 0
    %1173 = vmatpush1.bf16.msra.mxu0 0
    %1174 = vmatprep.subr.bf16.mxu0 0
    %1175 = vmatpush1.bf16.msra.mxu0 0
    %1176 = vmatprep.subr.bf16.mxu0 0
    %1177 = vmatpush1.bf16.msra.mxu0 0
    %1178 = vmatprep.subr.bf16.mxu0 0
    %1179 = vmatpush1.bf16.msra.mxu0 0
    %1180 = vmatprep.subr.bf16.mxu0 0
    %1181 = vmatpush1.bf16.msra.mxu0 0
    %1182 = vmatprep.mubr.bf16.mxu0 0
    %1183 = vmatmul.mubr.bf16.gmra.mrb[0].mxu0 %v1148
    %v1184 = vpop.f32.mrb[0].mxu0
    %v1185 = vadd.f32 %v1140, %v1184
    %v1186 = vpop.f32.mrb[0].mxu0
    %v1187 = vpop.f32.mrb[0].mxu0
    %v1188 = vpop.f32.mrb[0].mxu0
    %1189 = vdwg.mxu0
    %v1190 = vadd.f32 %v1185, %v719
    %v1191 = vsel %vm29, %v1190, 0.0
    %1192 = vadd.xlane.f32.xlu0 %v1191
    %v1193 = vpop.xlane.xlu0 %1192
    %v1194 = vmul.f32 %v1193, %v33
    %v1195 = vmul.f32 %v1190, %v1190
    %v1196 = vsel %vm29, %v1195, 0.0
    %1197 = vadd.xlane.f32.xlu0 %v1196
    %v1198 = vpop.xlane.xlu0 %1197
    %v1199 = vmul.f32 %v1198, %v33
    %v1200 = vmul.f32 %v1194, %v1194
    %v1201 = vsub.f32 %v1199, %v1200
    %v1202 = vsub.f32 %v1190, %v1194
    %v1203 = vadd.f32 %v1201, 1e-05
    %v1204 = vrsqrt.pop %v1203
    %v1205 = vmul.f32 %v1202, %v1204
    %v1206 = vlaneseq
    %v1207 = vshrl.u32 %v1206, 7
    %v1208 = vsub.s32 0, %v1207
    %v1209 = vrot.slane %v736, %v1208
    %v1210 = vmul.f32 %v1205, %v1209
    %v1211 = vlaneseq
    %v1212 = vshrl.u32 %v1211, 7
    %v1213 = vsub.s32 0, %v1212
    %v1214 = vrot.slane %v737, %v1213
    %v1215 = vadd.f32 %v1210, %v1214
    %v1216 = vpack.c.bf16 %v1215, %v1215
    %v1217 = vlaneseq
    %v1218 = vshrl.u32 %v1217, 7
    %v1219 = vsub.s32 0, %v1218
    %v1220 = vrot.slane %v738, %v1219
    %v1221 = vunpack.c.h.b16 %v721
    %v1222 = vunpack.c.h.b16 %v722
    %v1223 = vunpack.c.h.b16 %v723
    %v1224 = vunpack.c.h.b16 %v724
    %v1225 = vpack.c.b16 %v1222, %v1221
    %v1226 = vpack.c.b16 %v1224, %v1223
    %v1230 = vsel %vm29, %v1216, 0
    %1232 = vmatprep.subr.bf16.mxu0 0
    %1233 = vmatpush1.bf16.msra.mxu0 %v1225
    %1234 = vmatprep.subr.bf16.mxu0 0
    %1235 = vmatpush1.bf16.msra.mxu0 %v1226
    %1236 = vmatprep.subr.bf16.mxu0 0
    %1237 = vmatpush1.bf16.msra.mxu0 0
    %1238 = vmatprep.subr.bf16.mxu0 0
    %1239 = vmatpush1.bf16.msra.mxu0 0
    %1240 = vmatprep.subr.bf16.mxu0 0
    %1241 = vmatpush1.bf16.msra.mxu0 0
    %1242 = vmatprep.subr.bf16.mxu0 0
    %1243 = vmatpush1.bf16.msra.mxu0 0
    %1244 = vmatprep.subr.bf16.mxu0 0
    %1245 = vmatpush1.bf16.msra.mxu0 0
    %1246 = vmatprep.subr.bf16.mxu0 0
    %1247 = vmatpush1.bf16.msra.mxu0 0
    %1248 = vmatprep.subr.bf16.mxu0 0
    %1249 = vmatpush1.bf16.msra.mxu0 0
    %1250 = vmatprep.subr.bf16.mxu0 0
    %1251 = vmatpush1.bf16.msra.mxu0 0
    %1252 = vmatprep.subr.bf16.mxu0 0
    %1253 = vmatpush1.bf16.msra.mxu0 0
    %1254 = vmatprep.subr.bf16.mxu0 0
    %1255 = vmatpush1.bf16.msra.mxu0 0
    %1256 = vmatprep.subr.bf16.mxu0 0
    %1257 = vmatpush1.bf16.msra.mxu0 0
    %1258 = vmatprep.subr.bf16.mxu0 0
    %1259 = vmatpush1.bf16.msra.mxu0 0
    %1260 = vmatprep.subr.bf16.mxu0 0
    %1261 = vmatpush1.bf16.msra.mxu0 0
    %1262 = vmatprep.subr.bf16.mxu0 0
    %1263 = vmatpush1.bf16.msra.mxu0 0
    %1264 = vmatprep.mubr.bf16.mxu0 0
    %1265 = vmatmul.mubr.bf16.gmra.mrb[0].mxu0 %v1230
    %v1266 = vpop.f32.mrb[0].mxu0
    %v1267 = vadd.f32 %v1220, %v1266
    %v1268 = vpop.f32.mrb[0].mxu0
    %v1269 = vpop.f32.mrb[0].mxu0
    %v1270 = vpop.f32.mrb[0].mxu0
    %1271 = vdwg.mxu0
    %v1272 = vmul.f32 %v1267, %v1267
    %v1273 = vmul.f32 %v1267, %v1272
    %v1274 = vmul.f32 %v1273, 0.044715
    %v1275 = vadd.f32 %v1267, %v1274
    %v1276 = vmul.f32 %v1275, 0.7978846
    %v1277 = vtanh.pop %v1276
    %v1278 = vadd.f32 %v1277, 1.0
    %v1279 = vmul.f32 %v1278, 0.5
    %v1280 = vmul.f32 %v1267, %v1279
    %v1281 = vpack.c.bf16 %v1280, %v1280
    %v1282 = vlaneseq
    %v1283 = vshrl.u32 %v1282, 7
    %v1284 = vsub.s32 0, %v1283
    %v1285 = vrot.slane %v739, %v1284
    %v1294 = vunpack.c.l.b16 %v726
    %v1295 = vunpack.c.l.b16 %v727
    %v1296 = vunpack.c.l.b16 %v728
    %v1297 = vunpack.c.l.b16 %v729
    %v1298 = vunpack.c.l.b16 %v730
    %v1299 = vunpack.c.l.b16 %v731
    %v1300 = vunpack.c.l.b16 %v732
    %v1301 = vunpack.c.l.b16 %v733
    %v1302 = vpack.c.b16 %v1295, %v1294
    %v1303 = vpack.c.b16 %v1297, %v1296
    %v1304 = vpack.c.b16 %v1299, %v1298
    %v1305 = vpack.c.b16 %v1301, %v1300
    %v1311 = vsel %vm650, %v1281, 0
    %1313 = vmatprep.subr.bf16.mxu0 0
    %1314 = vmatpush1.bf16.msra.mxu0 %v1302
    %1315 = vmatprep.subr.bf16.mxu0 0
    %1316 = vmatpush1.bf16.msra.mxu0 %v1303
    %1317 = vmatprep.subr.bf16.mxu0 0
    %1318 = vmatpush1.bf16.msra.mxu0 %v1304
    %1319 = vmatprep.subr.bf16.mxu0 0
    %1320 = vmatpush1.bf16.msra.mxu0 %v1305
    %1321 = vmatprep.subr.bf16.mxu0 0
    %1322 = vmatpush1.bf16.msra.mxu0 0
    %1323 = vmatprep.subr.bf16.mxu0 0
    %1324 = vmatpush1.bf16.msra.mxu0 0
    %1325 = vmatprep.subr.bf16.mxu0 0
    %1326 = vmatpush1.bf16.msra.mxu0 0
    %1327 = vmatprep.subr.bf16.mxu0 0
    %1328 = vmatpush1.bf16.msra.mxu0 0
    %1329 = vmatprep.subr.bf16.mxu0 0
    %1330 = vmatpush1.bf16.msra.mxu0 0
    %1331 = vmatprep.subr.bf16.mxu0 0
    %1332 = vmatpush1.bf16.msra.mxu0 0
    %1333 = vmatprep.subr.bf16.mxu0 0
    %1334 = vmatpush1.bf16.msra.mxu0 0
    %1335 = vmatprep.subr.bf16.mxu0 0
    %1336 = vmatpush1.bf16.msra.mxu0 0
    %1337 = vmatprep.subr.bf16.mxu0 0
    %1338 = vmatpush1.bf16.msra.mxu0 0
    %1339 = vmatprep.subr.bf16.mxu0 0
    %1340 = vmatpush1.bf16.msra.mxu0 0
    %1341 = vmatprep.subr.bf16.mxu0 0
    %1342 = vmatpush1.bf16.msra.mxu0 0
    %1343 = vmatprep.subr.bf16.mxu0 0
    %1344 = vmatpush1.bf16.msra.mxu0 0
    %1345 = vmatprep.mubr.bf16.mxu0 0
    %1346 = vmatmul.mubr.bf16.gmra.mrb[0].mxu0 %v1311
    %v1347 = vpop.f32.mrb[0].mxu0
    %v1348 = vadd.f32 %v1285, %v1347
    %v1349 = vpop.f32.mrb[0].mxu0
    %v1350 = vpop.f32.mrb[0].mxu0
    %v1351 = vpop.f32.mrb[0].mxu0
    %1352 = vdwg.mxu0
    %v1353 = vadd.f32 %v1348, %v1215
    %v1354 = vsel %vm29, %v1353, 0.0
    %1355 = vadd.xlane.f32.xlu0 %v1354
    %v1356 = vpop.xlane.xlu0 %1355
    %v1357 = vmul.f32 %v1356, %v33
    %v1358 = vmul.f32 %v1353, %v1353
    %v1359 = vsel %vm29, %v1358, 0.0
    %1360 = vadd.xlane.f32.xlu0 %v1359
    %v1361 = vpop.xlane.xlu0 %1360
    %v1362 = vmul.f32 %v1361, %v33
    %v1363 = vmul.f32 %v1357, %v1357
    %v1364 = vsub.f32 %v1362, %v1363
    %v1365 = vsub.f32 %v1353, %v1357
    %v1366 = vadd.f32 %v1364, 1e-05
    %v1367 = vrsqrt.pop %v1366
    %v1368 = vmul.f32 %v1365, %v1367
    %v1369 = vlaneseq
    %v1370 = vshrl.u32 %v1369, 7
    %v1371 = vsub.s32 0, %v1370
    %v1372 = vrot.slane %v740, %v1371
    %v1373 = vmul.f32 %v1368, %v1372
    %v1374 = vlaneseq
    %v1375 = vshrl.u32 %v1374, 7
    %v1376 = vsub.s32 0, %v1375
    %v1377 = vrot.slane %v741, %v1376
    %v1378 = vadd.f32 %v1373, %v1377
    %v1379 = vld [vmem:[%s3 + $0x1a] sm:$0x1]
    %v1380 = vld [vmem:[%s3 + $0x1b] sm:$0x1]
    %v1381 = vld [vmem:[%s3 + $0x1c] sm:$0xff]
    %v1382 = vld [vmem:[%s3 + $0x24] sm:$0xff]
    %v1383 = vld [vmem:[%s3 + $0x2c] sm:$0xff]
    %v1384 = vld [vmem:[%s3 + $0x34] sm:$0xf]
    %v1385 = vmul.f32 %v1378, %v1379
    %v1386 = vmul.f32 %v21, %v1381
    %v1387 = vmul.f32 %v22, %v1382
    %v1388 = vmul.f32 %v23, %v1383
    %v1389 = vmul.f32 %v24, %v1384
    %v1390 = vsel %vm29, %v1386, 0.0
    %v1391 = vsel %vm29, %v1387, 0.0
    %v1392 = vadd.f32 %v1390, %v1391
    %v1393 = vsel %vm29, %v1388, 0.0
    %v1394 = vadd.f32 %v1392, %v1393
    %vm1395 = vcmask 257024
    %v1396 = vsel %vm1395, %v1389, 0.0
    %v1397 = vadd.f32 %v1394, %v1396
    %v1398 = vrot.slane %v1397, 4
    %v1399 = vadd.f32 %v1397, %v1398
    %v1400 = vrot.slane %v1399, 2
    %v1401 = vadd.f32 %v1399, %v1400
    %v1402 = vrot.slane %v1401, 1
    %v1403 = vadd.f32 %v1401, %v1402
    %v1404 = vadd.f32 %v1385, %v1403
    %vm1405 = vcmask 253952
    %v1406 = vsel %vm1405, %v1404, 0.0
    %1407 = vadd.xlane.f32.xlu0 %v1406
    %v1408 = vpop.xlane.xlu0 %1407
    %v1409 = vadd.f32 %v1408, %v1380
    %v1410 = vxor.u32 %v1409, 2147483648
    %v1411 = vmul.f32 %v1410, 1.442695
    %v1412 = vpow.pop %v1411
    %v1413 = vadd.f32 %v1412, 1.0
    %v1414 = vrcp.pop %v1413
    %v1415 = vmul.f32 1.0, %v1414
    %vm1416 = vcmask 0
    %1417 = vst.msk [vmem:[#allocation2] sm:$0x1] %vm1416, %v1415
    // Predicated region
    $region18: #{roberta_hiagm_forward.1} parent=1 // pred_check
      _
    $region19: #{roberta_hiagm_forward.1} parent=1 // pred_check_branch
      %1419 = sbr.rel (0) target = $region21
    $region20: #{roberta_hiagm_forward.1} parent=1 // pred_region
      %s1421 = ssub.s32 16, 16
      %1422 = vsyncadd [#allocation3], %s1421
      %s1424 = sshll.u32 [#allocation2], 4
      %s1425 = int_to_ptr.vmem [resolvable:$true] %s1424
      %1427 = dma.vmem_to_hbm [thread:$0]  %s1425, 16, %s4, [#allocation3]
    $region21: #{roberta_hiagm_forward.1} parent=1 // pred_fallthru
      _
    // Predicated region
    $region22: #{roberta_hiagm_forward.1} parent=1 // pred_check
      _
    $region23: #{roberta_hiagm_forward.1} parent=1 // pred_check_branch
      %1429 = sbr.rel (0) target = $region25
    $region24: #{roberta_hiagm_forward.1} parent=1 // pred_region
      %1430 = dma.done [#allocation3], 16
    $region25: #{roberta_hiagm_forward.1} parent=1 // pred_fallthru
      _
    %1431 = vsyncpa [#allocation3], 1

</llo_original>
